<compile_context>
chip_gen: v7x
topology: tpu7x:2x2x1
jax: 0.10.0
libtpu: 0.0.40
codegen_flags: <defaults>
</compile_context>

<pallas_src>
import functools
import math

import jax
import jax.numpy as jnp
from jax.experimental import pallas as pl
from jax.experimental.pallas import tpu as pltpu

_LANE = 128
_SUBLANE_BF16 = 16  # bf16 packs two rows per 32-bit sublane


def _round_up(x: int, m: int) -> int:
    return ((x + m - 1) // m) * m


def _cdiv(a: int, b: int) -> int:
    return -(-a // b)


def _tpu_kind() -> str:
    try:
        return jax.devices()[0].device_kind.lower()
    except Exception:
        return ""


def _vmem_capacity_bytes(kind: str) -> int:
    try:
        cap = getattr(pltpu.get_tpu_info(), "vmem_capacity_bytes", None)
        if cap:
            return int(cap)
    except Exception:
        pass
    return (64 << 20) if "v7" in kind else (128 << 20)


def _act(x):
    # actfn="gelu": jax.nn.gelu default = tanh approximation (EUP tanh path).
    return jax.nn.gelu(x)


def _pad2(w, rows, cols):
    return jnp.pad(w, ((0, rows - w.shape[0]), (0, cols - w.shape[1])))


def _pad_bias(b, n):
    return jnp.pad(b.astype(jnp.float32), (0, n - b.shape[0])).reshape(1, n)


def nyquist_pos_emb(t, freqs):
    """Sin/cos embedding of scalar times t (batch,) -> (batch, 2*len(freqs))."""
    ang = 2.0 * jnp.pi * t[:, None].astype(jnp.float32) * freqs[None, :]
    return jnp.concatenate([jnp.sin(ang), jnp.cos(ang)], axis=-1)


# --------------------------------------------------------------------------- #
# Kernel
# --------------------------------------------------------------------------- #
def mlp_kernel(*refs, act_bf16: bool):
    """refs = (mu_ref, pos_ref, w0_mu, w0_pos, b0, w1, b1, ..., wL, bL, out_ref).

    First layer: mu @ W0_mu + pos @ W0_pos + b0 (the concat is fused into a
    split matmul).  Hidden layers: h = linear(gelu(h)); the final layer has no
    activation.  Inputs / weights are bf16; matmuls accumulate in f32 on the
    MXU; bias add is f32; GELU is bf16 on chips with bf16 VPU/EUP, f32 on v5e.
    """
    mu_ref, pos_ref = refs[0], refs[1]
    out_ref = refs[-1]
    params = refs[2:-1]

    w0_mu, w0_pos, b0 = params[0], params[1], params[2]
    h = jnp.dot(mu_ref[...], w0_mu[...], preferred_element_type=jnp.float32)
    h = h + jnp.dot(pos_ref[...], w0_pos[...], preferred_element_type=jnp.float32)
    h = h + b0[...]

    rest = params[3:]
    for i in range(len(rest) // 2):
        w, b = rest[2 * i], rest[2 * i + 1]
        if act_bf16:
            a = _act(h.astype(jnp.bfloat16))        # bf16 VPU/EUP (v6e/v7x)
        else:
            a = _act(h).astype(jnp.bfloat16)        # f32 VPU/EUP (v5e)
        h = jnp.dot(a, w[...], preferred_element_type=jnp.float32) + b[...]
    out_ref[...] = h.astype(out_ref.dtype)


# --------------------------------------------------------------------------- #
# One-time parameter preparation (padding / splitting / bf16 casting)
# --------------------------------------------------------------------------- #
def prepare_denoising_mlp(params, pos_emb_freqs, data_shape):
    """Pad / split / bf16-cast the MLP weights once; reuse across forwards."""
    n_dim = math.prod(data_shape)
    pe_size = 2 * pos_emb_freqs.shape[0]
    hidden = params[0][0].shape[1]
    n_linear = len(params)

    n_dim_p = _round_up(n_dim, _LANE)
    pe_p = _round_up(pe_size, _LANE)
    hid_p = _round_up(hidden, _LANE)

    w0, b0 = params[0]
    assert w0.shape[0] == n_dim + pe_size, "fourier_features must be None"
    flat = [
        _pad2(w0[:n_dim], n_dim_p, hid_p).astype(jnp.bfloat16),   # W0_mu
        _pad2(w0[n_dim:], pe_p, hid_p).astype(jnp.bfloat16),      # W0_pos
        _pad_bias(b0, hid_p),                                      # b0 (f32)
    ]
    layer_out_dims = []
    for li in range(1, n_linear):
        w, b = params[li]
        out_p = hid_p if li < n_linear - 1 else n_dim_p
        flat += [_pad2(w, hid_p, out_p).astype(jnp.bfloat16), _pad_bias(b, out_p)]
        layer_out_dims.append(out_p)

    flat = tuple(jax.block_until_ready(jax.device_put(a)) for a in flat)
    return dict(
        flat=flat,
        n_dim=n_dim, n_dim_p=n_dim_p,
        pe_size=pe_size, pe_p=pe_p,
        hidden=hidden, hid_p=hid_p,
        n_linear=n_linear,
        layer_out_dims=tuple(layer_out_dims),
        weight_elems_real=sum(int(w.size) for (w, _) in params),
    )


# --------------------------------------------------------------------------- #
# Forward
# --------------------------------------------------------------------------- #
def denoising_mlp_forward(mu, t, prepared, pos_emb_freqs, data_shape, *, block_m=512):
    """Pallas-backed forward: mu (B, *data_shape), t (B,) -> (B, *data_shape)."""
    batch = mu.shape[0]
    n_dim, n_dim_p = prepared["n_dim"], prepared["n_dim_p"]
    pe_size, pe_p = prepared["pe_size"], prepared["pe_p"]
    hidden, hid_p = prepared["hidden"], prepared["hid_p"]
    n_linear = prepared["n_linear"]
    layer_out_dims = prepared["layer_out_dims"]
    flat = prepared["flat"]

    kind = _tpu_kind()
    act_bf16 = any(v in kind for v in ("v6", "v7"))   # bf16 VPU/EUP chips

    # ----- batch tile selection (multiple of 16, adaptive, megacore-aware) ----
    if "v5" in kind:
        block_m = min(block_m, 256)     # 4x128^2 MXU; keep tiles modest on v5e
    min_tiles = 2 if ("v7" in kind and batch >= 2 * _SUBLANE_BF16) else 1
    n_tiles = max(_cdiv(batch, block_m), min_tiles)
    tm = _round_up(_cdiv(batch, n_tiles), _SUBLANE_BF16)
    # Keep the f32 hidden activation working set modest (vreg / spill pressure).
    while tm > 128 and tm * hid_p * 4 > (4 << 20):
        tm //= 2
    tm = max(_SUBLANE_BF16, _round_up(tm, _SUBLANE_BF16))
    batch_p = _round_up(batch, tm)
    grid = (batch_p // tm,)

    # ----- glue: flatten mu, tiny sin/cos embedding, bf16 cast, zero-pad ------
    x = mu.reshape(batch, n_dim).astype(jnp.bfloat16)
    x = jnp.pad(x, ((0, batch_p - batch), (0, n_dim_p - n_dim)))
    pos = nyquist_pos_emb(t, pos_emb_freqs).astype(jnp.bfloat16)
    pos = jnp.pad(pos, ((0, batch_p - batch), (0, pe_p - pe_size)))

    kernel = functools.partial(mlp_kernel, act_bf16=act_bf16)

    # ----- VMEM / cost accounting ---------------------------------------------
    vmem_cap = _vmem_capacity_bytes(kind)
    param_bytes = sum(int(a.size) * a.dtype.itemsize for a in flat)
    # double-buffered bf16 input tiles + f32 output tile
    act_tile_bytes = 2 * (tm * (n_dim_p + pe_p) * 2 + tm * n_dim_p * 4)
    # in-kernel temporaries: f32 h, f32/bf16 gelu, bf16 matmul operand, f32 out
    temp_bytes = tm * hid_p * (4 + 4 + 2) + tm * max(hid_p, n_dim_p) * 4
    headroom = 8 << 20                                   # Mosaic internal scratch

    cost = pl.CostEstimate(
        flops=2 * batch * prepared["weight_elems_real"],
        transcendentals=batch * hidden * (n_linear - 1),
        bytes_accessed=param_bytes + int(x.size) * 2 + int(pos.size) * 2
        + batch_p * n_dim_p * 4,
    )

    def _call(single_buffer_weights):
        def wspec(shape):
            if single_buffer_weights:
                return pl.BlockSpec(shape, lambda i: (0, 0),
                                    pipeline_mode=pl.Buffered(1))
            return pl.BlockSpec(shape, lambda i: (0, 0))

        in_specs = [
            pl.BlockSpec((tm, n_dim_p), lambda i: (i, 0)),   # mu tile (bf16)
            pl.BlockSpec((tm, pe_p), lambda i: (i, 0)),      # pos tile (bf16)
            wspec((n_dim_p, hid_p)),                         # W0_mu (resident)
            wspec((pe_p, hid_p)),                            # W0_pos (resident)
            wspec((1, hid_p)),                               # b0 (resident)
        ]
        for out_p in layer_out_dims:
            in_specs += [wspec((hid_p, out_p)), wspec((1, out_p))]

        weight_factor = 1 if single_buffer_weights else 2
        needed = weight_factor * param_bytes + act_tile_bytes + temp_bytes + headroom
        vmem_limit = int(min(int(0.85 * vmem_cap), max(32 << 20, needed)))

        out = pl.pallas_call(
            kernel,
            out_shape=jax.ShapeDtypeStruct((batch_p, n_dim_p), jnp.float32),
            grid_spec=pltpu.PrefetchScalarGridSpec(
                num_scalar_prefetch=0,
                grid=grid,
                in_specs=in_specs,
                out_specs=pl.BlockSpec((tm, n_dim_p), lambda i: (i, 0)),
            ),
            compiler_params=pltpu.CompilerParams(
                dimension_semantics=("parallel",),
                vmem_limit_bytes=vmem_limit,
            ),
            cost_estimate=cost,
        )(x, pos, *flat)
        return jax.block_until_ready(out)

    try:
        out = _call(True)            # single-buffered resident weights
    except Exception:
        out = _call(False)           # fallback: default (double-buffered) specs

    return out[:batch, :n_dim].reshape((batch,) + tuple(data_shape))


# --------------------------------------------------------------------------- #
# Pure-JAX reference (same precision policy as the kernel)
# --------------------------------------------------------------------------- #
def reference_forward(mu, t, params, pos_emb_freqs, data_shape, act_bf16):
    batch = mu.shape[0]
    n_dim = math.prod(data_shape)
    h = jnp.concatenate(
        [mu.reshape(batch, n_dim), nyquist_pos_emb(t, pos_emb_freqs)], axis=-1
    ).astype(jnp.bfloat16)
    z_out = None
    for i, (w, b) in enumerate(params):
        z = jnp.dot(h, w.astype(jnp.bfloat16),
                    preferred_element_type=jnp.float32) + b
        if i < len(params) - 1:
            h = _act(z.astype(jnp.bfloat16)) if act_bf16 else _act(z).astype(jnp.bfloat16)
        else:
            z_out = z
    return z_out.reshape((batch,) + tuple(data_shape))


def init_params(key, in_features, n_dim, hidden_width, layers, zero_init):
    """Deterministic synthetic init. dims: in -> hidden x layers -> n_dim."""
    dims = [in_features] + [hidden_width] * layers + [n_dim]
    keys = jax.random.split(key, len(dims) - 1)
    params = []
    for i, k in enumerate(keys):
        fan_in = dims[i]
        w = jax.random.normal(k, (dims[i], dims[i + 1]), jnp.float32) / jnp.sqrt(
            float(fan_in))
        b = jnp.zeros((dims[i + 1],), jnp.float32)
        if zero_init and i == len(keys) - 1:
            w = jnp.zeros_like(w)     # matches self.layers[-1].weight/bias .zero_()
        params.append((w, b))
    return params


if __name__ == "__main__":
    # Small shapes consistent with the module's forward.
    data_shape = (4, 4)          # self.data_shape; n_dim = 16
    batch = 2
    hidden_width = 32
    layers = 2                   # hidden layers
    n_freqs = 4                  # pos_emb.size = 2 * n_freqs = 8
    zero_init = False            # keep output non-trivial for the demo

    n_dim = math.prod(data_shape)
    in_features = n_dim + 2 * n_freqs  # fourier_features is None

    key = jax.random.PRNGKey(0)
    k_mu, k_t, k_p = jax.random.split(key, 3)
    mu = jax.random.normal(k_mu, (batch,) + data_shape, jnp.float32)
    t = jax.random.uniform(k_t, (batch,), jnp.float32)

    # "Nyquist" frequencies: linearly spaced, topping out at the Nyquist rate.
    pos_emb_freqs = (jnp.arange(n_freqs, dtype=jnp.float32) + 1.0) / 2.0

    params = init_params(k_p, in_features, n_dim, hidden_width, layers, zero_init)

    prepared = prepare_denoising_mlp(params, pos_emb_freqs, data_shape)
    out = denoising_mlp_forward(mu, t, prepared, pos_emb_freqs, data_shape)
    out = jax.block_until_ready(out)

    act_bf16 = any(v in _tpu_kind() for v in ("v6", "v7"))
    ref = reference_forward(mu, t, params, pos_emb_freqs, data_shape, act_bf16)
    assert out.shape == (batch,) + data_shape
    assert jnp.allclose(out, ref, atol=2e-3, rtol=2e-3), "kernel mismatch vs reference"

    print("KERNEL_OK")
</pallas_src>

<mosaic_0001>
module attributes {stable_mosaic.version = 11 : i64} {
  func.func @mlp_kernel(%arg0: i32, %arg1: memref<16x128xbf16, #tpu.memory_space<vmem>>, %arg2: memref<16x128xbf16, #tpu.memory_space<vmem>>, %arg3: memref<128x128xbf16, #tpu.memory_space<vmem>>, %arg4: memref<128x128xbf16, #tpu.memory_space<vmem>>, %arg5: memref<1x128xf32, #tpu.memory_space<vmem>>, %arg6: memref<128x128xbf16, #tpu.memory_space<vmem>>, %arg7: memref<1x128xf32, #tpu.memory_space<vmem>>, %arg8: memref<128x128xbf16, #tpu.memory_space<vmem>>, %arg9: memref<1x128xf32, #tpu.memory_space<vmem>>, %arg10: memref<16x128xf32, #tpu.memory_space<vmem>>) attributes {dimension_semantics = [#tpu.dimension_semantics<parallel>], iteration_bounds = array<i64: 1>, scalar_prefetch = 0 : i64, scratch_operands = 0 : i64, tpu.core_type = #tpu.core_type<tc>, window_params = [{transform_indices = @transform_0, window_bounds = array<i64: 16, 128>}, {transform_indices = @transform_1, window_bounds = array<i64: 16, 128>}, {pipeline_mode = #tpu.pipeline_mode<synchronous>, transform_indices = @transform_2, window_bounds = array<i64: 128, 128>}, {pipeline_mode = #tpu.pipeline_mode<synchronous>, transform_indices = @transform_3, window_bounds = array<i64: 128, 128>}, {pipeline_mode = #tpu.pipeline_mode<synchronous>, transform_indices = @transform_4, window_bounds = array<i64: 1, 128>}, {pipeline_mode = #tpu.pipeline_mode<synchronous>, transform_indices = @transform_5, window_bounds = array<i64: 128, 128>}, {pipeline_mode = #tpu.pipeline_mode<synchronous>, transform_indices = @transform_6, window_bounds = array<i64: 1, 128>}, {pipeline_mode = #tpu.pipeline_mode<synchronous>, transform_indices = @transform_7, window_bounds = array<i64: 128, 128>}, {pipeline_mode = #tpu.pipeline_mode<synchronous>, transform_indices = @transform_8, window_bounds = array<i64: 1, 128>}, {transform_indices = @transform_9, window_bounds = array<i64: 16, 128>}]} {
    %c0 = arith.constant 0 : index
    %c0_0 = arith.constant 0 : index
    %0 = vector.load %arg1[%c0, %c0_0] : memref<16x128xbf16, #tpu.memory_space<vmem>>, vector<16x128xbf16>
    %c0_1 = arith.constant 0 : index
    %c0_2 = arith.constant 0 : index
    %1 = vector.load %arg3[%c0_1, %c0_2] : memref<128x128xbf16, #tpu.memory_space<vmem>>, vector<128x128xbf16>
    %cst = arith.constant dense<0.000000e+00> : vector<16x128xf32>
    %2 = tpu.matmul %0, %1, %cst {dimension_numbers = #tpu.dot_dimension_numbers<[1], [0], [0], [1], [0, 0, 1, 1], [], []>} : vector<16x128xbf16>, vector<128x128xbf16>, vector<16x128xf32> -> vector<16x128xf32>
    %c0_3 = arith.constant 0 : index
    %c0_4 = arith.constant 0 : index
    %3 = vector.load %arg2[%c0_3, %c0_4] : memref<16x128xbf16, #tpu.memory_space<vmem>>, vector<16x128xbf16>
    %c0_5 = arith.constant 0 : index
    %c0_6 = arith.constant 0 : index
    %4 = vector.load %arg4[%c0_5, %c0_6] : memref<128x128xbf16, #tpu.memory_space<vmem>>, vector<128x128xbf16>
    %cst_7 = arith.constant dense<0.000000e+00> : vector<16x128xf32>
    %5 = tpu.matmul %3, %4, %cst_7 {dimension_numbers = #tpu.dot_dimension_numbers<[1], [0], [0], [1], [0, 0, 1, 1], [], []>} : vector<16x128xbf16>, vector<128x128xbf16>, vector<16x128xf32> -> vector<16x128xf32>
    %6 = arith.addf %2, %5 : vector<16x128xf32>
    %c0_8 = arith.constant 0 : index
    %c0_9 = arith.constant 0 : index
    %7 = vector.load %arg5[%c0_8, %c0_9] : memref<1x128xf32, #tpu.memory_space<vmem>>, vector<1x128xf32>
    %8 = vector.broadcast %7 : vector<1x128xf32> to vector<16x128xf32>
    %9 = arith.addf %6, %8 : vector<16x128xf32>
    %10 = arith.mulf %9, %9 : vector<16x128xf32>
    %11 = arith.mulf %9, %10 : vector<16x128xf32>
    %cst_10 = arith.constant 4.471500e-02 : f32
    %12 = vector.broadcast %cst_10 : f32 to vector<16x128xf32>
    %13 = arith.mulf %12, %11 : vector<16x128xf32>
    %14 = arith.addf %9, %13 : vector<16x128xf32>
    %cst_11 = arith.constant 0.797884583 : f32
    %15 = vector.broadcast %cst_11 : f32 to vector<16x128xf32>
    %16 = arith.mulf %15, %14 : vector<16x128xf32>
    %17 = math.tanh %16 : vector<16x128xf32>
    %cst_12 = arith.constant 1.000000e+00 : f32
    %18 = vector.broadcast %cst_12 : f32 to vector<16x128xf32>
    %19 = arith.addf %18, %17 : vector<16x128xf32>
    %cst_13 = arith.constant 5.000000e-01 : f32
    %20 = vector.broadcast %cst_13 : f32 to vector<16x128xf32>
    %21 = arith.mulf %20, %19 : vector<16x128xf32>
    %22 = arith.mulf %9, %21 : vector<16x128xf32>
    %23 = arith.truncf %22 : vector<16x128xf32> to vector<16x128xbf16>
    %c0_14 = arith.constant 0 : index
    %c0_15 = arith.constant 0 : index
    %24 = vector.load %arg6[%c0_14, %c0_15] : memref<128x128xbf16, #tpu.memory_space<vmem>>, vector<128x128xbf16>
    %cst_16 = arith.constant dense<0.000000e+00> : vector<16x128xf32>
    %25 = tpu.matmul %23, %24, %cst_16 {dimension_numbers = #tpu.dot_dimension_numbers<[1], [0], [0], [1], [0, 0, 1, 1], [], []>} : vector<16x128xbf16>, vector<128x128xbf16>, vector<16x128xf32> -> vector<16x128xf32>
    %c0_17 = arith.constant 0 : index
    %c0_18 = arith.constant 0 : index
    %26 = vector.load %arg7[%c0_17, %c0_18] : memref<1x128xf32, #tpu.memory_space<vmem>>, vector<1x128xf32>
    %27 = vector.broadcast %26 : vector<1x128xf32> to vector<16x128xf32>
    %28 = arith.addf %25, %27 : vector<16x128xf32>
    %29 = arith.mulf %28, %28 : vector<16x128xf32>
    %30 = arith.mulf %28, %29 : vector<16x128xf32>
    %cst_19 = arith.constant 4.471500e-02 : f32
    %31 = vector.broadcast %cst_19 : f32 to vector<16x128xf32>
    %32 = arith.mulf %31, %30 : vector<16x128xf32>
    %33 = arith.addf %28, %32 : vector<16x128xf32>
    %cst_20 = arith.constant 0.797884583 : f32
    %34 = vector.broadcast %cst_20 : f32 to vector<16x128xf32>
    %35 = arith.mulf %34, %33 : vector<16x128xf32>
    %36 = math.tanh %35 : vector<16x128xf32>
    %cst_21 = arith.constant 1.000000e+00 : f32
    %37 = vector.broadcast %cst_21 : f32 to vector<16x128xf32>
    %38 = arith.addf %37, %36 : vector<16x128xf32>
    %cst_22 = arith.constant 5.000000e-01 : f32
    %39 = vector.broadcast %cst_22 : f32 to vector<16x128xf32>
    %40 = arith.mulf %39, %38 : vector<16x128xf32>
    %41 = arith.mulf %28, %40 : vector<16x128xf32>
    %42 = arith.truncf %41 : vector<16x128xf32> to vector<16x128xbf16>
    %c0_23 = arith.constant 0 : index
    %c0_24 = arith.constant 0 : index
    %43 = vector.load %arg8[%c0_23, %c0_24] : memref<128x128xbf16, #tpu.memory_space<vmem>>, vector<128x128xbf16>
    %cst_25 = arith.constant dense<0.000000e+00> : vector<16x128xf32>
    %44 = tpu.matmul %42, %43, %cst_25 {dimension_numbers = #tpu.dot_dimension_numbers<[1], [0], [0], [1], [0, 0, 1, 1], [], []>} : vector<16x128xbf16>, vector<128x128xbf16>, vector<16x128xf32> -> vector<16x128xf32>
    %c0_26 = arith.constant 0 : index
    %c0_27 = arith.constant 0 : index
    %45 = vector.load %arg9[%c0_26, %c0_27] : memref<1x128xf32, #tpu.memory_space<vmem>>, vector<1x128xf32>
    %46 = vector.broadcast %45 : vector<1x128xf32> to vector<16x128xf32>
    %47 = arith.addf %44, %46 : vector<16x128xf32>
    %c0_28 = arith.constant 0 : index
    %c0_29 = arith.constant 0 : index
    %48 = vector.load %arg10[%c0_28, %c0_29] : memref<16x128xf32, #tpu.memory_space<vmem>>, vector<16x128xf32>
    tpu.vector_store %arg10[%c0_28, %c0_29], %47 {strides = array<i32>} : memref<16x128xf32, #tpu.memory_space<vmem>>, vector<16x128xf32>,
    return
  }
  func.func @transform_0(%arg0: i32) -> (i32, i32) {
    %c0_i32 = arith.constant 0 : i32
    %c0_i32_0 = arith.constant 0 : i32
    return %arg0, %c0_i32 : i32, i32
  }
  func.func @transform_1(%arg0: i32) -> (i32, i32) {
    %c0_i32 = arith.constant 0 : i32
    %c0_i32_0 = arith.constant 0 : i32
    return %arg0, %c0_i32 : i32, i32
  }
  func.func @transform_2(%arg0: i32) -> (i32, i32) {
    %c0_i32 = arith.constant 0 : i32
    %c0_i32_0 = arith.constant 0 : i32
    %c0_i32_1 = arith.constant 0 : i32
    return %c0_i32, %c0_i32_0 : i32, i32
  }
  func.func @transform_3(%arg0: i32) -> (i32, i32) {
    %c0_i32 = arith.constant 0 : i32
    %c0_i32_0 = arith.constant 0 : i32
    %c0_i32_1 = arith.constant 0 : i32
    return %c0_i32, %c0_i32_0 : i32, i32
  }
  func.func @transform_4(%arg0: i32) -> (i32, i32) {
    %c0_i32 = arith.constant 0 : i32
    %c0_i32_0 = arith.constant 0 : i32
    %c0_i32_1 = arith.constant 0 : i32
    return %c0_i32, %c0_i32_0 : i32, i32
  }
  func.func @transform_5(%arg0: i32) -> (i32, i32) {
    %c0_i32 = arith.constant 0 : i32
    %c0_i32_0 = arith.constant 0 : i32
    %c0_i32_1 = arith.constant 0 : i32
    return %c0_i32, %c0_i32_0 : i32, i32
  }
  func.func @transform_6(%arg0: i32) -> (i32, i32) {
    %c0_i32 = arith.constant 0 : i32
    %c0_i32_0 = arith.constant 0 : i32
    %c0_i32_1 = arith.constant 0 : i32
    return %c0_i32, %c0_i32_0 : i32, i32
  }
  func.func @transform_7(%arg0: i32) -> (i32, i32) {
    %c0_i32 = arith.constant 0 : i32
    %c0_i32_0 = arith.constant 0 : i32
    %c0_i32_1 = arith.constant 0 : i32
    return %c0_i32, %c0_i32_0 : i32, i32
  }
  func.func @transform_8(%arg0: i32) -> (i32, i32) {
    %c0_i32 = arith.constant 0 : i32
    %c0_i32_0 = arith.constant 0 : i32
    %c0_i32_1 = arith.constant 0 : i32
    return %c0_i32, %c0_i32_0 : i32, i32
  }
  func.func @transform_9(%arg0: i32) -> (i32, i32) {
    %c0_i32 = arith.constant 0 : i32
    %c0_i32_0 = arith.constant 0 : i32
    return %arg0, %c0_i32 : i32, i32
  }
}

module attributes {stable_mosaic.version = 11 : i64} {
  func.func @mlp_kernel(%arg0: i32, %arg1: memref<16x128xbf16, #tpu.memory_space<vmem>>, %arg2: memref<16x128xbf16, #tpu.memory_space<vmem>>, %arg3: memref<128x128xbf16, #tpu.memory_space<vmem>>, %arg4: memref<128x128xbf16, #tpu.memory_space<vmem>>, %arg5: memref<1x128xf32, #tpu.memory_space<vmem>>, %arg6: memref<128x128xbf16, #tpu.memory_space<vmem>>, %arg7: memref<1x128xf32, #tpu.memory_space<vmem>>, %arg8: memref<128x128xbf16, #tpu.memory_space<vmem>>, %arg9: memref<1x128xf32, #tpu.memory_space<vmem>>, %arg10: memref<16x128xf32, #tpu.memory_space<vmem>>) attributes {dimension_semantics = [#tpu.dimension_semantics<parallel>], iteration_bounds = array<i64: 1>, scalar_prefetch = 0 : i64, scratch_operands = 0 : i64, tpu.core_type = #tpu.core_type<tc>, window_params = [{transform_indices = @transform_0, window_bounds = array<i64: 16, 128>}, {transform_indices = @transform_1, window_bounds = array<i64: 16, 128>}, {pipeline_mode = #tpu.pipeline_mode<synchronous>, transform_indices = @transform_2, window_bounds = array<i64: 128, 128>}, {pipeline_mode = #tpu.pipeline_mode<synchronous>, transform_indices = @transform_3, window_bounds = array<i64: 128, 128>}, {pipeline_mode = #tpu.pipeline_mode<synchronous>, transform_indices = @transform_4, window_bounds = array<i64: 1, 128>}, {pipeline_mode = #tpu.pipeline_mode<synchronous>, transform_indices = @transform_5, window_bounds = array<i64: 128, 128>}, {pipeline_mode = #tpu.pipeline_mode<synchronous>, transform_indices = @transform_6, window_bounds = array<i64: 1, 128>}, {pipeline_mode = #tpu.pipeline_mode<synchronous>, transform_indices = @transform_7, window_bounds = array<i64: 128, 128>}, {pipeline_mode = #tpu.pipeline_mode<synchronous>, transform_indices = @transform_8, window_bounds = array<i64: 1, 128>}, {transform_indices = @transform_9, window_bounds = array<i64: 16, 128>}]} {
    %c0 = arith.constant 0 : index
    %c0_0 = arith.constant 0 : index
    %0 = vector.load %arg1[%c0, %c0_0] : memref<16x128xbf16, #tpu.memory_space<vmem>>, vector<16x128xbf16>
    %c0_1 = arith.constant 0 : index
    %c0_2 = arith.constant 0 : index
    %1 = vector.load %arg3[%c0_1, %c0_2] : memref<128x128xbf16, #tpu.memory_space<vmem>>, vector<128x128xbf16>
    %cst = arith.constant dense<0.000000e+00> : vector<16x128xf32>
    %2 = tpu.matmul %0, %1, %cst {dimension_numbers = #tpu.dot_dimension_numbers<[1], [0], [0], [1], [0, 0, 1, 1], [], []>} : vector<16x128xbf16>, vector<128x128xbf16>, vector<16x128xf32> -> vector<16x128xf32>
    %c0_3 = arith.constant 0 : index
    %c0_4 = arith.constant 0 : index
    %3 = vector.load %arg2[%c0_3, %c0_4] : memref<16x128xbf16, #tpu.memory_space<vmem>>, vector<16x128xbf16>
    %c0_5 = arith.constant 0 : index
    %c0_6 = arith.constant 0 : index
    %4 = vector.load %arg4[%c0_5, %c0_6] : memref<128x128xbf16, #tpu.memory_space<vmem>>, vector<128x128xbf16>
    %cst_7 = arith.constant dense<0.000000e+00> : vector<16x128xf32>
    %5 = tpu.matmul %3, %4, %cst_7 {dimension_numbers = #tpu.dot_dimension_numbers<[1], [0], [0], [1], [0, 0, 1, 1], [], []>} : vector<16x128xbf16>, vector<128x128xbf16>, vector<16x128xf32> -> vector<16x128xf32>
    %6 = arith.addf %2, %5 : vector<16x128xf32>
    %c0_8 = arith.constant 0 : index
    %c0_9 = arith.constant 0 : index
    %7 = vector.load %arg5[%c0_8, %c0_9] : memref<1x128xf32, #tpu.memory_space<vmem>>, vector<1x128xf32>
    %8 = vector.broadcast %7 : vector<1x128xf32> to vector<16x128xf32>
    %9 = arith.addf %6, %8 : vector<16x128xf32>
    %10 = arith.mulf %9, %9 : vector<16x128xf32>
    %11 = arith.mulf %9, %10 : vector<16x128xf32>
    %cst_10 = arith.constant 4.471500e-02 : f32
    %12 = vector.broadcast %cst_10 : f32 to vector<16x128xf32>
    %13 = arith.mulf %12, %11 : vector<16x128xf32>
    %14 = arith.addf %9, %13 : vector<16x128xf32>
    %cst_11 = arith.constant 0.797884583 : f32
    %15 = vector.broadcast %cst_11 : f32 to vector<16x128xf32>
    %16 = arith.mulf %15, %14 : vector<16x128xf32>
    %17 = math.tanh %16 : vector<16x128xf32>
    %cst_12 = arith.constant 1.000000e+00 : f32
    %18 = vector.broadcast %cst_12 : f32 to vector<16x128xf32>
    %19 = arith.addf %18, %17 : vector<16x128xf32>
    %cst_13 = arith.constant 5.000000e-01 : f32
    %20 = vector.broadcast %cst_13 : f32 to vector<16x128xf32>
    %21 = arith.mulf %20, %19 : vector<16x128xf32>
    %22 = arith.mulf %9, %21 : vector<16x128xf32>
    %23 = arith.truncf %22 : vector<16x128xf32> to vector<16x128xbf16>
    %c0_14 = arith.constant 0 : index
    %c0_15 = arith.constant 0 : index
    %24 = vector.load %arg6[%c0_14, %c0_15] : memref<128x128xbf16, #tpu.memory_space<vmem>>, vector<128x128xbf16>
    %cst_16 = arith.constant dense<0.000000e+00> : vector<16x128xf32>
    %25 = tpu.matmul %23, %24, %cst_16 {dimension_numbers = #tpu.dot_dimension_numbers<[1], [0], [0], [1], [0, 0, 1, 1], [], []>} : vector<16x128xbf16>, vector<128x128xbf16>, vector<16x128xf32> -> vector<16x128xf32>
    %c0_17 = arith.constant 0 : index
    %c0_18 = arith.constant 0 : index
    %26 = vector.load %arg7[%c0_17, %c0_18] : memref<1x128xf32, #tpu.memory_space<vmem>>, vector<1x128xf32>
    %27 = vector.broadcast %26 : vector<1x128xf32> to vector<16x128xf32>
    %28 = arith.addf %25, %27 : vector<16x128xf32>
    %29 = arith.mulf %28, %28 : vector<16x128xf32>
    %30 = arith.mulf %28, %29 : vector<16x128xf32>
    %cst_19 = arith.constant 4.471500e-02 : f32
    %31 = vector.broadcast %cst_19 : f32 to vector<16x128xf32>
    %32 = arith.mulf %31, %30 : vector<16x128xf32>
    %33 = arith.addf %28, %32 : vector<16x128xf32>
    %cst_20 = arith.constant 0.797884583 : f32
    %34 = vector.broadcast %cst_20 : f32 to vector<16x128xf32>
    %35 = arith.mulf %34, %33 : vector<16x128xf32>
    %36 = math.tanh %35 : vector<16x128xf32>
    %cst_21 = arith.constant 1.000000e+00 : f32
    %37 = vector.broadcast %cst_21 : f32 to vector<16x128xf32>
    %38 = arith.addf %37, %36 : vector<16x128xf32>
    %cst_22 = arith.constant 5.000000e-01 : f32
    %39 = vector.broadcast %cst_22 : f32 to vector<16x128xf32>
    %40 = arith.mulf %39, %38 : vector<16x128xf32>
    %41 = arith.mulf %28, %40 : vector<16x128xf32>
    %42 = arith.truncf %41 : vector<16x128xf32> to vector<16x128xbf16>
    %c0_23 = arith.constant 0 : index
    %c0_24 = arith.constant 0 : index
    %43 = vector.load %arg8[%c0_23, %c0_24] : memref<128x128xbf16, #tpu.memory_space<vmem>>, vector<128x128xbf16>
    %cst_25 = arith.constant dense<0.000000e+00> : vector<16x128xf32>
    %44 = tpu.matmul %42, %43, %cst_25 {dimension_numbers = #tpu.dot_dimension_numbers<[1], [0], [0], [1], [0, 0, 1, 1], [], []>} : vector<16x128xbf16>, vector<128x128xbf16>, vector<16x128xf32> -> vector<16x128xf32>
    %c0_26 = arith.constant 0 : index
    %c0_27 = arith.constant 0 : index
    %45 = vector.load %arg9[%c0_26, %c0_27] : memref<1x128xf32, #tpu.memory_space<vmem>>, vector<1x128xf32>
    %46 = vector.broadcast %45 : vector<1x128xf32> to vector<16x128xf32>
    %47 = arith.addf %44, %46 : vector<16x128xf32>
    %c0_28 = arith.constant 0 : index
    %c0_29 = arith.constant 0 : index
    %48 = vector.load %arg10[%c0_28, %c0_29] : memref<16x128xf32, #tpu.memory_space<vmem>>, vector<16x128xf32>
    tpu.vector_store %arg10[%c0_28, %c0_29], %47 {strides = array<i32>} : memref<16x128xf32, #tpu.memory_space<vmem>>, vector<16x128xf32>,
    return
  }
  func.func @transform_0(%arg0: i32) -> (i32, i32) {
    %c0_i32 = arith.constant 0 : i32
    %c0_i32_0 = arith.constant 0 : i32
    return %arg0, %c0_i32 : i32, i32
  }
  func.func @transform_1(%arg0: i32) -> (i32, i32) {
    %c0_i32 = arith.constant 0 : i32
    %c0_i32_0 = arith.constant 0 : i32
    return %arg0, %c0_i32 : i32, i32
  }
  func.func @transform_2(%arg0: i32) -> (i32, i32) {
    %c0_i32 = arith.constant 0 : i32
    %c0_i32_0 = arith.constant 0 : i32
    %c0_i32_1 = arith.constant 0 : i32
    return %c0_i32, %c0_i32_0 : i32, i32
  }
  func.func @transform_3(%arg0: i32) -> (i32, i32) {
    %c0_i32 = arith.constant 0 : i32
    %c0_i32_0 = arith.constant 0 : i32
    %c0_i32_1 = arith.constant 0 : i32
    return %c0_i32, %c0_i32_0 : i32, i32
  }
  func.func @transform_4(%arg0: i32) -> (i32, i32) {
    %c0_i32 = arith.constant 0 : i32
    %c0_i32_0 = arith.constant 0 : i32
    %c0_i32_1 = arith.constant 0 : i32
    return %c0_i32, %c0_i32_0 : i32, i32
  }
  func.func @transform_5(%arg0: i32) -> (i32, i32) {
    %c0_i32 = arith.constant 0 : i32
    %c0_i32_0 = arith.constant 0 : i32
    %c0_i32_1 = arith.constant 0 : i32
    return %c0_i32, %c0_i32_0 : i32, i32
  }
  func.func @transform_6(%arg0: i32) -> (i32, i32) {
    %c0_i32 = arith.constant 0 : i32
    %c0_i32_0 = arith.constant 0 : i32
    %c0_i32_1 = arith.constant 0 : i32
    return %c0_i32, %c0_i32_0 : i32, i32
  }
  func.func @transform_7(%arg0: i32) -> (i32, i32) {
    %c0_i32 = arith.constant 0 : i32
    %c0_i32_0 = arith.constant 0 : i32
    %c0_i32_1 = arith.constant 0 : i32
    return %c0_i32, %c0_i32_0 : i32, i32
  }
  func.func @transform_8(%arg0: i32) -> (i32, i32) {
    %c0_i32 = arith.constant 0 : i32
    %c0_i32_0 = arith.constant 0 : i32
    %c0_i32_1 = arith.constant 0 : i32
    return %c0_i32, %c0_i32_0 : i32, i32
  }
  func.func @transform_9(%arg0: i32) -> (i32, i32) {
    %c0_i32 = arith.constant 0 : i32
    %c0_i32_0 = arith.constant 0 : i32
    return %arg0, %c0_i32 : i32, i32
  }
}

</mosaic_0001>

<llo_original>
// kernel: tpu_custom_call.1
$region0: #{tpu_custom_call.1}
  #allocation0 [shape = 'u32[]', space=smem, size = 0x4, offset = 0x4, fixed_abs, tag = 'smem constant byte address 0x4 - core index']
  #allocation1 [shape = 'u32[144,128]{1,0:T(1,128)}', space=vmem, size = 0x12000, scoped, tag = 'internal scratch']
  %s0 = inlined_call_operand.hbm [shape: bf16[16,128], index: 0, kind: input, shape index: {}]
  %s1 = inlined_call_operand.hbm [shape: bf16[16,128], index: 1, kind: input, shape index: {}]
  %s2 = inlined_call_operand.hbm [shape: bf16[128,128], index: 2, kind: input, shape index: {}]
  %s3 = inlined_call_operand.hbm [shape: bf16[128,128], index: 3, kind: input, shape index: {}]
  %s4 = inlined_call_operand.vmem [shape: f32[1,128], index: 4, kind: input, shape index: {}]
  %s5 = inlined_call_operand.hbm [shape: bf16[128,128], index: 5, kind: input, shape index: {}]
  %s6 = inlined_call_operand.vmem [shape: f32[1,128], index: 6, kind: input, shape index: {}]
  %s7 = inlined_call_operand.hbm [shape: bf16[128,128], index: 7, kind: input, shape index: {}]
  %s8 = inlined_call_operand.vmem [shape: f32[1,128], index: 8, kind: input, shape index: {}]
  %s9 = inlined_call_operand.hbm [shape: f32[16,128], index: 9, kind: output, shape index: {}]
  %s10 = sld [smem:[#allocation0]]
  $region70: #{tpu_custom_call.1} parent=0
    _
  %s12 = ssub.s32 1, %s10
  %s13 = scalar_select 0, %s12, %s10
  $region1: #{tpu_custom_call.1} parent=0
    #allocation2 [shape = 'u8[4096]{0}', space=vmem, size = 0x1000, scoped, tag = 'input window, operand 0, single buffered']
    #allocation3 [shape = 's32[1]{0}', space=sflag, size = 0x4, scoped, tag = 'scoped memory for tpu_custom_call.1']
    #allocation4 [shape = 's32[1]{0}', space=sflag, size = 0x4, scoped, tag = 'scoped memory for tpu_custom_call.1']
    #allocation5 [shape = 'u8[4096]{0}', space=vmem, size = 0x1000, scoped, tag = 'input window, operand 1, single buffered']
    #allocation6 [shape = 's32[1]{0}', space=sflag, size = 0x4, scoped, tag = 'scoped memory for tpu_custom_call.1']
    #allocation7 [shape = 'u8[32768]{0}', space=vmem, size = 0x8000, scoped, tag = 'input window, operand 2, single buffered']
    #allocation8 [shape = 'u8[32768]{0}', space=vmem, size = 0x8000, scoped, tag = 'input window, operand 3, single buffered']
    #allocation9 [shape = 's32[1]{0}', space=sflag, size = 0x4, scoped, tag = 'scoped memory for tpu_custom_call.1']
    #allocation10 [shape = 'u8[32768]{0}', space=vmem, size = 0x8000, scoped, tag = 'input window, operand 5, single buffered']
    #allocation11 [shape = 'u8[32768]{0}', space=vmem, size = 0x8000, scoped, tag = 'input window, operand 7, single buffered']
    #allocation12 [shape = 's32[1]{0}', space=sflag, size = 0x4, scoped, tag = 'scoped memory for tpu_custom_call.1']
    #allocation13 [shape = 'u8[8192]{0}', space=vmem, size = 0x2000, scoped, tag = 'output window, operand 0, single buffered']
    %14 = vsyncpa [#allocation3], 0
    %15 = vsyncpa [#allocation6], 0
    %16 = vsyncpa [#allocation9], 0
    %17 = vsyncpa [#allocation12], 0
    %18 = vsyncpa [#allocation4], 0
    // Predicated region
    $region2: #{tpu_custom_call.1} parent=1 // pred_check
      _
    $region3: #{tpu_custom_call.1} parent=1 // pred_check_branch
      %20 = sbr.rel (0) target = $region5
    $region4: #{tpu_custom_call.1} parent=1 // pred_region
      %s22 = ssub.s32 128, 128
      %23 = vsyncadd [#allocation3], %s22
      %s24 = sshll.u32 [#allocation2], 4
      %s25 = int_to_ptr.vmem [resolvable:$true] %s24
      %30 = dma.hbm_to_vmem [thread:$0]  %s0, 128, %s25, [#allocation3], 64, 64, 4
    $region5: #{tpu_custom_call.1} parent=1 // pred_fallthru
      _
    // Predicated region
    $region6: #{tpu_custom_call.1} parent=1 // pred_check
      _
    $region7: #{tpu_custom_call.1} parent=1 // pred_check_branch
      %32 = sbr.rel (0) target = $region9
    $region8: #{tpu_custom_call.1} parent=1 // pred_region
      %s34 = ssub.s32 128, 128
      %35 = vsyncadd [#allocation6], %s34
      %s36 = sshll.u32 [#allocation5], 4
      %s37 = int_to_ptr.vmem [resolvable:$true] %s36
      %42 = dma.hbm_to_vmem [thread:$0]  %s1, 128, %s37, [#allocation6], 64, 64, 4
    $region9: #{tpu_custom_call.1} parent=1 // pred_fallthru
      _
    // Predicated region
    $region10: #{tpu_custom_call.1} parent=1 // pred_check
      _
    $region11: #{tpu_custom_call.1} parent=1 // pred_check_branch
      %44 = sbr.rel (0) target = $region13
    $region12: #{tpu_custom_call.1} parent=1 // pred_region
      %s46 = ssub.s32 1024, 1024
      %47 = vsyncadd [#allocation6], %s46
      %s48 = sshll.u32 [#allocation7], 4
      %s49 = int_to_ptr.vmem [resolvable:$true] %s48
      %54 = dma.hbm_to_vmem [thread:$0]  %s2, 1024, %s49, [#allocation6], 64, 64, 4
    $region13: #{tpu_custom_call.1} parent=1 // pred_fallthru
      _
    // Predicated region
    $region14: #{tpu_custom_call.1} parent=1 // pred_check
      _
    $region15: #{tpu_custom_call.1} parent=1 // pred_check_branch
      %56 = sbr.rel (0) target = $region17
    $region16: #{tpu_custom_call.1} parent=1 // pred_region
      %s58 = ssub.s32 1024, 1024
      %59 = vsyncadd [#allocation9], %s58
      %s60 = sshll.u32 [#allocation8], 4
      %s61 = int_to_ptr.vmem [resolvable:$true] %s60
      %66 = dma.hbm_to_vmem [thread:$0]  %s3, 1024, %s61, [#allocation9], 64, 64, 4
    $region17: #{tpu_custom_call.1} parent=1 // pred_fallthru
      _
    // Predicated region
    $region18: #{tpu_custom_call.1} parent=1 // pred_check
      _
    $region19: #{tpu_custom_call.1} parent=1 // pred_check_branch
      %68 = sbr.rel (0) target = $region21
    $region20: #{tpu_custom_call.1} parent=1 // pred_region
      _
    $region21: #{tpu_custom_call.1} parent=1 // pred_fallthru
      _
    // Predicated region
    $region22: #{tpu_custom_call.1} parent=1 // pred_check
      _
    $region23: #{tpu_custom_call.1} parent=1 // pred_check_branch
      %70 = sbr.rel (0) target = $region25
    $region24: #{tpu_custom_call.1} parent=1 // pred_region
      %s72 = ssub.s32 1024, 1024
      %73 = vsyncadd [#allocation9], %s72
      %s74 = sshll.u32 [#allocation10], 4
      %s75 = int_to_ptr.vmem [resolvable:$true] %s74
      %80 = dma.hbm_to_vmem [thread:$0]  %s5, 1024, %s75, [#allocation9], 64, 64, 4
    $region25: #{tpu_custom_call.1} parent=1 // pred_fallthru
      _
    // Predicated region
    $region26: #{tpu_custom_call.1} parent=1 // pred_check
      _
    $region27: #{tpu_custom_call.1} parent=1 // pred_check_branch
      %82 = sbr.rel (0) target = $region29
    $region28: #{tpu_custom_call.1} parent=1 // pred_region
      _
    $region29: #{tpu_custom_call.1} parent=1 // pred_fallthru
      _
    // Predicated region
    $region30: #{tpu_custom_call.1} parent=1 // pred_check
      _
    $region31: #{tpu_custom_call.1} parent=1 // pred_check_branch
      %84 = sbr.rel (0) target = $region33
    $region32: #{tpu_custom_call.1} parent=1 // pred_region
      %s86 = ssub.s32 1024, 1024
      %87 = vsyncadd [#allocation12], %s86
      %s88 = sshll.u32 [#allocation11], 4
      %s89 = int_to_ptr.vmem [resolvable:$true] %s88
      %94 = dma.hbm_to_vmem [thread:$0]  %s7, 1024, %s89, [#allocation12], 64, 64, 4
    $region33: #{tpu_custom_call.1} parent=1 // pred_fallthru
      _
    // Predicated region
    $region34: #{tpu_custom_call.1} parent=1 // pred_check
      _
    $region35: #{tpu_custom_call.1} parent=1 // pred_check_branch
      %96 = sbr.rel (0) target = $region37
    $region36: #{tpu_custom_call.1} parent=1 // pred_region
      _
    $region37: #{tpu_custom_call.1} parent=1 // pred_fallthru
      _
    // Predicated region
    $region38: #{tpu_custom_call.1} parent=1 // pred_check
      _
    $region39: #{tpu_custom_call.1} parent=1 // pred_check_branch
      %98 = sbr.rel (0) target = $region41
    $region40: #{tpu_custom_call.1} parent=1 // pred_region
      %99 = dma.done [#allocation3], 128
    $region41: #{tpu_custom_call.1} parent=1 // pred_fallthru
      _
    // Predicated region
    $region42: #{tpu_custom_call.1} parent=1 // pred_check
      _
    $region43: #{tpu_custom_call.1} parent=1 // pred_check_branch
      %101 = sbr.rel (0) target = $region45
    $region44: #{tpu_custom_call.1} parent=1 // pred_region
      %102 = dma.done [#allocation6], 128
    $region45: #{tpu_custom_call.1} parent=1 // pred_fallthru
      _
    // Predicated region
    $region46: #{tpu_custom_call.1} parent=1 // pred_check
      _
    $region47: #{tpu_custom_call.1} parent=1 // pred_check_branch
      %104 = sbr.rel (0) target = $region49
    $region48: #{tpu_custom_call.1} parent=1 // pred_region
      %105 = dma.done [#allocation6], 1024
    $region49: #{tpu_custom_call.1} parent=1 // pred_fallthru
      _
    // Predicated region
    $region50: #{tpu_custom_call.1} parent=1 // pred_check
      _
    $region51: #{tpu_custom_call.1} parent=1 // pred_check_branch
      %107 = sbr.rel (0) target = $region53
    $region52: #{tpu_custom_call.1} parent=1 // pred_region
      %108 = dma.done [#allocation9], 1024
    $region53: #{tpu_custom_call.1} parent=1 // pred_fallthru
      _
    // Predicated region
    $region54: #{tpu_custom_call.1} parent=1 // pred_check
      _
    $region55: #{tpu_custom_call.1} parent=1 // pred_check_branch
      %110 = sbr.rel (0) target = $region57
    $region56: #{tpu_custom_call.1} parent=1 // pred_region
      %111 = dma.done [#allocation9], 1024
    $region57: #{tpu_custom_call.1} parent=1 // pred_fallthru
      _
    // Predicated region
    $region58: #{tpu_custom_call.1} parent=1 // pred_check
      _
    $region59: #{tpu_custom_call.1} parent=1 // pred_check_branch
      %113 = sbr.rel (0) target = $region61
    $region60: #{tpu_custom_call.1} parent=1 // pred_region
      %114 = dma.done [#allocation12], 1024
    $region61: #{tpu_custom_call.1} parent=1 // pred_fallthru
      _
    %v116 = vld [vmem:[#allocation2] sm:$0xf]
    %v117 = vld [vmem:[#allocation2 + $0x4] sm:$0xf]
    %v118 = vld [vmem:[#allocation7] sm:$0xf]
    %v119 = vld [vmem:[#allocation7 + $0x4] sm:$0xf]
    %v120 = vld [vmem:[#allocation7 + $0x8] sm:$0xf]
    %v121 = vld [vmem:[#allocation7 + $0xc] sm:$0xf]
    %v122 = vld [vmem:[#allocation7 + $0x10] sm:$0xf]
    %v123 = vld [vmem:[#allocation7 + $0x14] sm:$0xf]
    %v124 = vld [vmem:[#allocation7 + $0x18] sm:$0xf]
    %v125 = vld [vmem:[#allocation7 + $0x1c] sm:$0xf]
    %v126 = vld [vmem:[#allocation7 + $0x20] sm:$0xf]
    %v127 = vld [vmem:[#allocation7 + $0x24] sm:$0xf]
    %v128 = vld [vmem:[#allocation7 + $0x28] sm:$0xf]
    %v129 = vld [vmem:[#allocation7 + $0x2c] sm:$0xf]
    %v130 = vld [vmem:[#allocation7 + $0x30] sm:$0xf]
    %v131 = vld [vmem:[#allocation7 + $0x34] sm:$0xf]
    %v132 = vld [vmem:[#allocation7 + $0x38] sm:$0xf]
    %v133 = vld [vmem:[#allocation7 + $0x3c] sm:$0xf]
    %v134 = vld [vmem:[#allocation5] sm:$0xf]
    %v135 = vld [vmem:[#allocation5 + $0x4] sm:$0xf]
    %v136 = vld [vmem:[#allocation8] sm:$0xf]
    %v137 = vld [vmem:[#allocation8 + $0x4] sm:$0xf]
    %v138 = vld [vmem:[#allocation8 + $0x8] sm:$0xf]
    %v139 = vld [vmem:[#allocation8 + $0xc] sm:$0xf]
    %v140 = vld [vmem:[#allocation8 + $0x10] sm:$0xf]
    %v141 = vld [vmem:[#allocation8 + $0x14] sm:$0xf]
    %v142 = vld [vmem:[#allocation8 + $0x18] sm:$0xf]
    %v143 = vld [vmem:[#allocation8 + $0x1c] sm:$0xf]
    %v144 = vld [vmem:[#allocation8 + $0x20] sm:$0xf]
    %v145 = vld [vmem:[#allocation8 + $0x24] sm:$0xf]
    %v146 = vld [vmem:[#allocation8 + $0x28] sm:$0xf]
    %v147 = vld [vmem:[#allocation8 + $0x2c] sm:$0xf]
    %v148 = vld [vmem:[#allocation8 + $0x30] sm:$0xf]
    %v149 = vld [vmem:[#allocation8 + $0x34] sm:$0xf]
    %v150 = vld [vmem:[#allocation8 + $0x38] sm:$0xf]
    %v151 = vld [vmem:[#allocation8 + $0x3c] sm:$0xf]
    %v154 = vunpack.c.l.b16 %v134
    %v155 = vunpack.c.l.b16 %v135
    %v156 = vpack.c.b16 %v155, %v154
    %v174 = vunpack.c.l.b16 %v136
    %v175 = vunpack.c.l.b16 %v137
    %v176 = vunpack.c.l.b16 %v138
    %v177 = vunpack.c.l.b16 %v139
    %v178 = vunpack.c.l.b16 %v140
    %v179 = vunpack.c.l.b16 %v141
    %v180 = vunpack.c.l.b16 %v142
    %v181 = vunpack.c.l.b16 %v143
    %v182 = vunpack.c.l.b16 %v144
    %v183 = vunpack.c.l.b16 %v145
    %v184 = vunpack.c.l.b16 %v146
    %v185 = vunpack.c.l.b16 %v147
    %v186 = vunpack.c.l.b16 %v148
    %v187 = vunpack.c.l.b16 %v149
    %v188 = vunpack.c.l.b16 %v150
    %v189 = vunpack.c.l.b16 %v151
    %v190 = vpack.c.b16 %v175, %v174
    %v191 = vpack.c.b16 %v177, %v176
    %v192 = vpack.c.b16 %v179, %v178
    %v193 = vpack.c.b16 %v181, %v180
    %v194 = vpack.c.b16 %v183, %v182
    %v195 = vpack.c.b16 %v185, %v184
    %v196 = vpack.c.b16 %v187, %v186
    %v197 = vpack.c.b16 %v189, %v188
    %206 = vmatprep.subr.bf16.mxu0 0
    %207 = vmatpush1.bf16.msra.mxu0 %v190
    %208 = vmatprep.subr.bf16.mxu0 0
    %209 = vmatpush1.bf16.msra.mxu0 %v191
    %210 = vmatprep.subr.bf16.mxu0 0
    %211 = vmatpush1.bf16.msra.mxu0 %v192
    %212 = vmatprep.subr.bf16.mxu0 0
    %213 = vmatpush1.bf16.msra.mxu0 %v193
    %214 = vmatprep.subr.bf16.mxu0 0
    %215 = vmatpush1.bf16.msra.mxu0 %v194
    %216 = vmatprep.subr.bf16.mxu0 0
    %217 = vmatpush1.bf16.msra.mxu0 %v195
    %218 = vmatprep.subr.bf16.mxu0 0
    %219 = vmatpush1.bf16.msra.mxu0 %v196
    %220 = vmatprep.subr.bf16.mxu0 0
    %221 = vmatpush1.bf16.msra.mxu0 %v197
    %222 = vmatprep.subr.bf16.mxu0 0
    %223 = vmatpush1.bf16.msra.mxu0 0
    %224 = vmatprep.subr.bf16.mxu0 0
    %225 = vmatpush1.bf16.msra.mxu0 0
    %226 = vmatprep.subr.bf16.mxu0 0
    %227 = vmatpush1.bf16.msra.mxu0 0
    %228 = vmatprep.subr.bf16.mxu0 0
    %229 = vmatpush1.bf16.msra.mxu0 0
    %230 = vmatprep.subr.bf16.mxu0 0
    %231 = vmatpush1.bf16.msra.mxu0 0
    %232 = vmatprep.subr.bf16.mxu0 0
    %233 = vmatpush1.bf16.msra.mxu0 0
    %234 = vmatprep.subr.bf16.mxu0 0
    %235 = vmatpush1.bf16.msra.mxu0 0
    %236 = vmatprep.subr.bf16.mxu0 0
    %237 = vmatpush1.bf16.msra.mxu0 0
    %238 = vmatprep.mubr.bf16.mxu0 0
    %239 = vmatmul.mubr.bf16.gmra.mrb[0].mxu0 %v156
    %v240 = vpop.f32.mrb[0].mxu0
    %v241 = vadd.f32 0.0, %v240
    %v242 = vpop.f32.mrb[0].mxu0
    %v243 = vpop.f32.mrb[0].mxu0
    %v244 = vadd.f32 0.0, %v243
    %v245 = vpop.f32.mrb[0].mxu0
    %246 = vdwg.mxu0
    %v249 = vunpack.c.l.b16 %v116
    %v250 = vunpack.c.l.b16 %v117
    %v251 = vpack.c.b16 %v250, %v249
    %v269 = vunpack.c.l.b16 %v118
    %v270 = vunpack.c.l.b16 %v119
    %v271 = vunpack.c.l.b16 %v120
    %v272 = vunpack.c.l.b16 %v121
    %v273 = vunpack.c.l.b16 %v122
    %v274 = vunpack.c.l.b16 %v123
    %v275 = vunpack.c.l.b16 %v124
    %v276 = vunpack.c.l.b16 %v125
    %v277 = vunpack.c.l.b16 %v126
    %v278 = vunpack.c.l.b16 %v127
    %v279 = vunpack.c.l.b16 %v128
    %v280 = vunpack.c.l.b16 %v129
    %v281 = vunpack.c.l.b16 %v130
    %v282 = vunpack.c.l.b16 %v131
    %v283 = vunpack.c.l.b16 %v132
    %v284 = vunpack.c.l.b16 %v133
    %v285 = vpack.c.b16 %v270, %v269
    %v286 = vpack.c.b16 %v272, %v271
    %v287 = vpack.c.b16 %v274, %v273
    %v288 = vpack.c.b16 %v276, %v275
    %v289 = vpack.c.b16 %v278, %v277
    %v290 = vpack.c.b16 %v280, %v279
    %v291 = vpack.c.b16 %v282, %v281
    %v292 = vpack.c.b16 %v284, %v283
    %301 = vmatprep.subr.bf16.mxu0 0
    %302 = vmatpush1.bf16.msra.mxu0 %v285
    %303 = vmatprep.subr.bf16.mxu0 0
    %304 = vmatpush1.bf16.msra.mxu0 %v286
    %305 = vmatprep.subr.bf16.mxu0 0
    %306 = vmatpush1.bf16.msra.mxu0 %v287
    %307 = vmatprep.subr.bf16.mxu0 0
    %308 = vmatpush1.bf16.msra.mxu0 %v288
    %309 = vmatprep.subr.bf16.mxu0 0
    %310 = vmatpush1.bf16.msra.mxu0 %v289
    %311 = vmatprep.subr.bf16.mxu0 0
    %312 = vmatpush1.bf16.msra.mxu0 %v290
    %313 = vmatprep.subr.bf16.mxu0 0
    %314 = vmatpush1.bf16.msra.mxu0 %v291
    %315 = vmatprep.subr.bf16.mxu0 0
    %316 = vmatpush1.bf16.msra.mxu0 %v292
    %317 = vmatprep.subr.bf16.mxu0 0
    %318 = vmatpush1.bf16.msra.mxu0 0
    %319 = vmatprep.subr.bf16.mxu0 0
    %320 = vmatpush1.bf16.msra.mxu0 0
    %321 = vmatprep.subr.bf16.mxu0 0
    %322 = vmatpush1.bf16.msra.mxu0 0
    %323 = vmatprep.subr.bf16.mxu0 0
    %324 = vmatpush1.bf16.msra.mxu0 0
    %325 = vmatprep.subr.bf16.mxu0 0
    %326 = vmatpush1.bf16.msra.mxu0 0
    %327 = vmatprep.subr.bf16.mxu0 0
    %328 = vmatpush1.bf16.msra.mxu0 0
    %329 = vmatprep.subr.bf16.mxu0 0
    %330 = vmatpush1.bf16.msra.mxu0 0
    %331 = vmatprep.subr.bf16.mxu0 0
    %332 = vmatpush1.bf16.msra.mxu0 0
    %333 = vmatprep.mubr.bf16.mxu0 0
    %334 = vmatmul.mubr.bf16.gmra.mrb[0].mxu0 %v251
    %v335 = vpop.f32.mrb[0].mxu0
    %v336 = vadd.f32 %v241, %v335
    %v337 = vpop.f32.mrb[0].mxu0
    %v338 = vpop.f32.mrb[0].mxu0
    %v339 = vadd.f32 %v244, %v338
    %v340 = vpop.f32.mrb[0].mxu0
    %341 = vdwg.mxu0
    %v342 = vld [vmem:[%s4] sm:$0x1]
    %v344 = vlaneseq
    %v345 = vshrl.u32 %v344, 7
    %v346 = vsub.s32 0, %v345
    %v347 = vrot.slane %v342, %v346
    %v349 = vadd.f32 %v336, %v347
    %v350 = vadd.f32 %v339, %v347
    %v351 = vmul.f32 %v349, %v349
    %v352 = vmul.f32 %v350, %v350
    %v353 = vmul.f32 %v349, %v351
    %v354 = vmul.f32 %v350, %v352
    %v355 = vmul.f32 %v353, 0.044715
    %v356 = vmul.f32 %v354, 0.044715
    %v357 = vadd.f32 %v349, %v355
    %v358 = vadd.f32 %v350, %v356
    %v359 = vmul.f32 %v357, 0.7978846
    %v360 = vmul.f32 %v358, 0.7978846
    %v361 = vtanh.pop %v359
    %v362 = vtanh.pop %v360
    %v363 = vadd.f32 %v361, 1.0
    %v364 = vadd.f32 %v362, 1.0
    %v365 = vmul.f32 %v363, 0.5
    %v366 = vmul.f32 %v364, 0.5
    %v367 = vmul.f32 %v349, %v365
    %v368 = vmul.f32 %v350, %v366
    %v369 = vpack.c.bf16 %v368, %v367
    %v370 = vld [vmem:[#allocation10] sm:$0xf]
    %v371 = vld [vmem:[#allocation10 + $0x4] sm:$0xf]
    %v372 = vld [vmem:[#allocation10 + $0x8] sm:$0xf]
    %v373 = vld [vmem:[#allocation10 + $0xc] sm:$0xf]
    %v374 = vld [vmem:[#allocation10 + $0x10] sm:$0xf]
    %v375 = vld [vmem:[#allocation10 + $0x14] sm:$0xf]
    %v376 = vld [vmem:[#allocation10 + $0x18] sm:$0xf]
    %v377 = vld [vmem:[#allocation10 + $0x1c] sm:$0xf]
    %v378 = vld [vmem:[#allocation10 + $0x20] sm:$0xf]
    %v379 = vld [vmem:[#allocation10 + $0x24] sm:$0xf]
    %v380 = vld [vmem:[#allocation10 + $0x28] sm:$0xf]
    %v381 = vld [vmem:[#allocation10 + $0x2c] sm:$0xf]
    %v382 = vld [vmem:[#allocation10 + $0x30] sm:$0xf]
    %v383 = vld [vmem:[#allocation10 + $0x34] sm:$0xf]
    %v384 = vld [vmem:[#allocation10 + $0x38] sm:$0xf]
    %v385 = vld [vmem:[#allocation10 + $0x3c] sm:$0xf]
    %v386 = vld [vmem:[%s6] sm:$0x1]
    %v388 = vlaneseq
    %v389 = vshrl.u32 %v388, 7
    %v390 = vsub.s32 0, %v389
    %v391 = vrot.slane %v386, %v390
    %v409 = vunpack.c.l.b16 %v370
    %v410 = vunpack.c.l.b16 %v371
    %v411 = vunpack.c.l.b16 %v372
    %v412 = vunpack.c.l.b16 %v373
    %v413 = vunpack.c.l.b16 %v374
    %v414 = vunpack.c.l.b16 %v375
    %v415 = vunpack.c.l.b16 %v376
    %v416 = vunpack.c.l.b16 %v377
    %v417 = vunpack.c.l.b16 %v378
    %v418 = vunpack.c.l.b16 %v379
    %v419 = vunpack.c.l.b16 %v380
    %v420 = vunpack.c.l.b16 %v381
    %v421 = vunpack.c.l.b16 %v382
    %v422 = vunpack.c.l.b16 %v383
    %v423 = vunpack.c.l.b16 %v384
    %v424 = vunpack.c.l.b16 %v385
    %v425 = vpack.c.b16 %v410, %v409
    %v426 = vpack.c.b16 %v412, %v411
    %v427 = vpack.c.b16 %v414, %v413
    %v428 = vpack.c.b16 %v416, %v415
    %v429 = vpack.c.b16 %v418, %v417
    %v430 = vpack.c.b16 %v420, %v419
    %v431 = vpack.c.b16 %v422, %v421
    %v432 = vpack.c.b16 %v424, %v423
    %441 = vmatprep.subr.bf16.mxu0 0
    %442 = vmatpush1.bf16.msra.mxu0 %v425
    %443 = vmatprep.subr.bf16.mxu0 0
    %444 = vmatpush1.bf16.msra.mxu0 %v426
    %445 = vmatprep.subr.bf16.mxu0 0
    %446 = vmatpush1.bf16.msra.mxu0 %v427
    %447 = vmatprep.subr.bf16.mxu0 0
    %448 = vmatpush1.bf16.msra.mxu0 %v428
    %449 = vmatprep.subr.bf16.mxu0 0
    %450 = vmatpush1.bf16.msra.mxu0 %v429
    %451 = vmatprep.subr.bf16.mxu0 0
    %452 = vmatpush1.bf16.msra.mxu0 %v430
    %453 = vmatprep.subr.bf16.mxu0 0
    %454 = vmatpush1.bf16.msra.mxu0 %v431
    %455 = vmatprep.subr.bf16.mxu0 0
    %456 = vmatpush1.bf16.msra.mxu0 %v432
    %457 = vmatprep.subr.bf16.mxu0 0
    %458 = vmatpush1.bf16.msra.mxu0 0
    %459 = vmatprep.subr.bf16.mxu0 0
    %460 = vmatpush1.bf16.msra.mxu0 0
    %461 = vmatprep.subr.bf16.mxu0 0
    %462 = vmatpush1.bf16.msra.mxu0 0
    %463 = vmatprep.subr.bf16.mxu0 0
    %464 = vmatpush1.bf16.msra.mxu0 0
    %465 = vmatprep.subr.bf16.mxu0 0
    %466 = vmatpush1.bf16.msra.mxu0 0
    %467 = vmatprep.subr.bf16.mxu0 0
    %468 = vmatpush1.bf16.msra.mxu0 0
    %469 = vmatprep.subr.bf16.mxu0 0
    %470 = vmatpush1.bf16.msra.mxu0 0
    %471 = vmatprep.subr.bf16.mxu0 0
    %472 = vmatpush1.bf16.msra.mxu0 0
    %473 = vmatprep.mubr.bf16.mxu0 0
    %474 = vmatmul.mubr.bf16.gmra.mrb[0].mxu0 %v369
    %v475 = vpop.f32.mrb[0].mxu0
    %v476 = vadd.f32 %v391, %v475
    %v477 = vpop.f32.mrb[0].mxu0
    %v478 = vpop.f32.mrb[0].mxu0
    %v479 = vadd.f32 %v391, %v478
    %v480 = vpop.f32.mrb[0].mxu0
    %481 = vdwg.mxu0
    %v482 = vmul.f32 %v476, %v476
    %v483 = vmul.f32 %v479, %v479
    %v484 = vmul.f32 %v476, %v482
    %v485 = vmul.f32 %v479, %v483
    %v486 = vmul.f32 %v484, 0.044715
    %v487 = vmul.f32 %v485, 0.044715
    %v488 = vadd.f32 %v476, %v486
    %v489 = vadd.f32 %v479, %v487
    %v490 = vmul.f32 %v488, 0.7978846
    %v491 = vmul.f32 %v489, 0.7978846
    %v492 = vtanh.pop %v490
    %v493 = vtanh.pop %v491
    %v494 = vadd.f32 %v492, 1.0
    %v495 = vadd.f32 %v493, 1.0
    %v496 = vmul.f32 %v494, 0.5
    %v497 = vmul.f32 %v495, 0.5
    %v498 = vmul.f32 %v476, %v496
    %v499 = vmul.f32 %v479, %v497
    %v500 = vpack.c.bf16 %v499, %v498
    %v501 = vld [vmem:[#allocation11] sm:$0xf]
    %v502 = vld [vmem:[#allocation11 + $0x4] sm:$0xf]
    %v503 = vld [vmem:[#allocation11 + $0x8] sm:$0xf]
    %v504 = vld [vmem:[#allocation11 + $0xc] sm:$0xf]
    %v505 = vld [vmem:[#allocation11 + $0x10] sm:$0xf]
    %v506 = vld [vmem:[#allocation11 + $0x14] sm:$0xf]
    %v507 = vld [vmem:[#allocation11 + $0x18] sm:$0xf]
    %v508 = vld [vmem:[#allocation11 + $0x1c] sm:$0xf]
    %v509 = vld [vmem:[#allocation11 + $0x20] sm:$0xf]
    %v510 = vld [vmem:[#allocation11 + $0x24] sm:$0xf]
    %v511 = vld [vmem:[#allocation11 + $0x28] sm:$0xf]
    %v512 = vld [vmem:[#allocation11 + $0x2c] sm:$0xf]
    %v513 = vld [vmem:[#allocation11 + $0x30] sm:$0xf]
    %v514 = vld [vmem:[#allocation11 + $0x34] sm:$0xf]
    %v515 = vld [vmem:[#allocation11 + $0x38] sm:$0xf]
    %v516 = vld [vmem:[#allocation11 + $0x3c] sm:$0xf]
    %v517 = vld [vmem:[%s8] sm:$0x1]
    %v519 = vlaneseq
    %v520 = vshrl.u32 %v519, 7
    %v521 = vsub.s32 0, %v520
    %v522 = vrot.slane %v517, %v521
    %v540 = vunpack.c.l.b16 %v501
    %v541 = vunpack.c.l.b16 %v502
    %v542 = vunpack.c.l.b16 %v503
    %v543 = vunpack.c.l.b16 %v504
    %v544 = vunpack.c.l.b16 %v505
    %v545 = vunpack.c.l.b16 %v506
    %v546 = vunpack.c.l.b16 %v507
    %v547 = vunpack.c.l.b16 %v508
    %v548 = vunpack.c.l.b16 %v509
    %v549 = vunpack.c.l.b16 %v510
    %v550 = vunpack.c.l.b16 %v511
    %v551 = vunpack.c.l.b16 %v512
    %v552 = vunpack.c.l.b16 %v513
    %v553 = vunpack.c.l.b16 %v514
    %v554 = vunpack.c.l.b16 %v515
    %v555 = vunpack.c.l.b16 %v516
    %v556 = vpack.c.b16 %v541, %v540
    %v557 = vpack.c.b16 %v543, %v542
    %v558 = vpack.c.b16 %v545, %v544
    %v559 = vpack.c.b16 %v547, %v546
    %v560 = vpack.c.b16 %v549, %v548
    %v561 = vpack.c.b16 %v551, %v550
    %v562 = vpack.c.b16 %v553, %v552
    %v563 = vpack.c.b16 %v555, %v554
    %572 = vmatprep.subr.bf16.mxu0 0
    %573 = vmatpush1.bf16.msra.mxu0 %v556
    %574 = vmatprep.subr.bf16.mxu0 0
    %575 = vmatpush1.bf16.msra.mxu0 %v557
    %576 = vmatprep.subr.bf16.mxu0 0
    %577 = vmatpush1.bf16.msra.mxu0 %v558
    %578 = vmatprep.subr.bf16.mxu0 0
    %579 = vmatpush1.bf16.msra.mxu0 %v559
    %580 = vmatprep.subr.bf16.mxu0 0
    %581 = vmatpush1.bf16.msra.mxu0 %v560
    %582 = vmatprep.subr.bf16.mxu0 0
    %583 = vmatpush1.bf16.msra.mxu0 %v561
    %584 = vmatprep.subr.bf16.mxu0 0
    %585 = vmatpush1.bf16.msra.mxu0 %v562
    %586 = vmatprep.subr.bf16.mxu0 0
    %587 = vmatpush1.bf16.msra.mxu0 %v563
    %588 = vmatprep.subr.bf16.mxu0 0
    %589 = vmatpush1.bf16.msra.mxu0 0
    %590 = vmatprep.subr.bf16.mxu0 0
    %591 = vmatpush1.bf16.msra.mxu0 0
    %592 = vmatprep.subr.bf16.mxu0 0
    %593 = vmatpush1.bf16.msra.mxu0 0
    %594 = vmatprep.subr.bf16.mxu0 0
    %595 = vmatpush1.bf16.msra.mxu0 0
    %596 = vmatprep.subr.bf16.mxu0 0
    %597 = vmatpush1.bf16.msra.mxu0 0
    %598 = vmatprep.subr.bf16.mxu0 0
    %599 = vmatpush1.bf16.msra.mxu0 0
    %600 = vmatprep.subr.bf16.mxu0 0
    %601 = vmatpush1.bf16.msra.mxu0 0
    %602 = vmatprep.subr.bf16.mxu0 0
    %603 = vmatpush1.bf16.msra.mxu0 0
    %604 = vmatprep.mubr.bf16.mxu0 0
    %605 = vmatmul.mubr.bf16.gmra.mrb[0].mxu0 %v500
    %v606 = vpop.f32.mrb[0].mxu0
    %v607 = vadd.f32 %v522, %v606
    %v608 = vpop.f32.mrb[0].mxu0
    %v609 = vpop.f32.mrb[0].mxu0
    %v610 = vadd.f32 %v522, %v609
    %v611 = vpop.f32.mrb[0].mxu0
    %612 = vdwg.mxu0
    %613 = vst [vmem:[#allocation13] sm:$0xff] %v607
    %614 = vst [vmem:[#allocation13 + $0x8] sm:$0xff] %v610
    // Predicated region
    $region62: #{tpu_custom_call.1} parent=1 // pred_check
      _
    $region63: #{tpu_custom_call.1} parent=1 // pred_check_branch
      %616 = sbr.rel (0) target = $region65
    $region64: #{tpu_custom_call.1} parent=1 // pred_region
      %s618 = ssub.s32 256, 256
      %619 = vsyncadd [#allocation4], %s618
      %s620 = sshll.u32 [#allocation13], 4
      %s621 = int_to_ptr.vmem [resolvable:$true] %s620
      %626 = dma.vmem_to_hbm [thread:$0]  %s621, 256, %s9, [#allocation4], 128, 128, 8
    $region65: #{tpu_custom_call.1} parent=1 // pred_fallthru
      _
    // Predicated region
    $region66: #{tpu_custom_call.1} parent=1 // pred_check
      _
    $region67: #{tpu_custom_call.1} parent=1 // pred_check_branch
      %628 = sbr.rel (0) target = $region69
    $region68: #{tpu_custom_call.1} parent=1 // pred_region
      %629 = dma.done [#allocation4], 256
    $region69: #{tpu_custom_call.1} parent=1 // pred_fallthru
      _
    %630 = vsyncpa [#allocation3], 1
    %631 = vsyncpa [#allocation6], 1
    %632 = vsyncpa [#allocation9], 1
    %633 = vsyncpa [#allocation12], 1
    %634 = vsyncpa [#allocation4], 1

// kernel: tpu_custom_call.1
$region0: #{tpu_custom_call.1}
  #allocation0 [shape = 'u32[]', space=smem, size = 0x4, offset = 0x4, fixed_abs, tag = 'smem constant byte address 0x4 - core index']
  #allocation1 [shape = 'u32[144,128]{1,0:T(1,128)}', space=vmem, size = 0x12000, scoped, tag = 'internal scratch']
  %s0 = inlined_call_operand.hbm [shape: bf16[16,128], index: 0, kind: input, shape index: {}]
  %s1 = inlined_call_operand.hbm [shape: bf16[16,128], index: 1, kind: input, shape index: {}]
  %s2 = inlined_call_operand.hbm [shape: bf16[128,128], index: 2, kind: input, shape index: {}]
  %s3 = inlined_call_operand.hbm [shape: bf16[128,128], index: 3, kind: input, shape index: {}]
  %s4 = inlined_call_operand.vmem [shape: f32[1,128], index: 4, kind: input, shape index: {}]
  %s5 = inlined_call_operand.hbm [shape: bf16[128,128], index: 5, kind: input, shape index: {}]
  %s6 = inlined_call_operand.vmem [shape: f32[1,128], index: 6, kind: input, shape index: {}]
  %s7 = inlined_call_operand.hbm [shape: bf16[128,128], index: 7, kind: input, shape index: {}]
  %s8 = inlined_call_operand.vmem [shape: f32[1,128], index: 8, kind: input, shape index: {}]
  %s9 = inlined_call_operand.hbm [shape: f32[16,128], index: 9, kind: output, shape index: {}]
  %s10 = sld [smem:[#allocation0]]
  $region70: #{tpu_custom_call.1} parent=0
    _
  %s12 = ssub.s32 1, %s10
  %s13 = scalar_select 0, %s12, %s10
  $region1: #{tpu_custom_call.1} parent=0
    #allocation2 [shape = 'u8[4096]{0}', space=vmem, size = 0x1000, scoped, tag = 'input window, operand 0, single buffered']
    #allocation3 [shape = 's32[1]{0}', space=sflag, size = 0x4, scoped, tag = 'scoped memory for tpu_custom_call.1']
    #allocation4 [shape = 's32[1]{0}', space=sflag, size = 0x4, scoped, tag = 'scoped memory for tpu_custom_call.1']
    #allocation5 [shape = 'u8[4096]{0}', space=vmem, size = 0x1000, scoped, tag = 'input window, operand 1, single buffered']
    #allocation6 [shape = 's32[1]{0}', space=sflag, size = 0x4, scoped, tag = 'scoped memory for tpu_custom_call.1']
    #allocation7 [shape = 'u8[32768]{0}', space=vmem, size = 0x8000, scoped, tag = 'input window, operand 2, single buffered']
    #allocation8 [shape = 'u8[32768]{0}', space=vmem, size = 0x8000, scoped, tag = 'input window, operand 3, single buffered']
    #allocation9 [shape = 's32[1]{0}', space=sflag, size = 0x4, scoped, tag = 'scoped memory for tpu_custom_call.1']
    #allocation10 [shape = 'u8[32768]{0}', space=vmem, size = 0x8000, scoped, tag = 'input window, operand 5, single buffered']
    #allocation11 [shape = 'u8[32768]{0}', space=vmem, size = 0x8000, scoped, tag = 'input window, operand 7, single buffered']
    #allocation12 [shape = 's32[1]{0}', space=sflag, size = 0x4, scoped, tag = 'scoped memory for tpu_custom_call.1']
    #allocation13 [shape = 'u8[8192]{0}', space=vmem, size = 0x2000, scoped, tag = 'output window, operand 0, single buffered']
    %14 = vsyncpa [#allocation3], 0
    %15 = vsyncpa [#allocation6], 0
    %16 = vsyncpa [#allocation9], 0
    %17 = vsyncpa [#allocation12], 0
    %18 = vsyncpa [#allocation4], 0
    // Predicated region
    $region2: #{tpu_custom_call.1} parent=1 // pred_check
      _
    $region3: #{tpu_custom_call.1} parent=1 // pred_check_branch
      %20 = sbr.rel (0) target = $region5
    $region4: #{tpu_custom_call.1} parent=1 // pred_region
      %s22 = ssub.s32 128, 128
      %23 = vsyncadd [#allocation3], %s22
      %s24 = sshll.u32 [#allocation2], 4
      %s25 = int_to_ptr.vmem [resolvable:$true] %s24
      %30 = dma.hbm_to_vmem [thread:$0]  %s0, 128, %s25, [#allocation3], 64, 64, 4
    $region5: #{tpu_custom_call.1} parent=1 // pred_fallthru
      _
    // Predicated region
    $region6: #{tpu_custom_call.1} parent=1 // pred_check
      _
    $region7: #{tpu_custom_call.1} parent=1 // pred_check_branch
      %32 = sbr.rel (0) target = $region9
    $region8: #{tpu_custom_call.1} parent=1 // pred_region
      %s34 = ssub.s32 128, 128
      %35 = vsyncadd [#allocation6], %s34
      %s36 = sshll.u32 [#allocation5], 4
      %s37 = int_to_ptr.vmem [resolvable:$true] %s36
      %42 = dma.hbm_to_vmem [thread:$0]  %s1, 128, %s37, [#allocation6], 64, 64, 4
    $region9: #{tpu_custom_call.1} parent=1 // pred_fallthru
      _
    // Predicated region
    $region10: #{tpu_custom_call.1} parent=1 // pred_check
      _
    $region11: #{tpu_custom_call.1} parent=1 // pred_check_branch
      %44 = sbr.rel (0) target = $region13
    $region12: #{tpu_custom_call.1} parent=1 // pred_region
      %s46 = ssub.s32 1024, 1024
      %47 = vsyncadd [#allocation6], %s46
      %s48 = sshll.u32 [#allocation7], 4
      %s49 = int_to_ptr.vmem [resolvable:$true] %s48
      %54 = dma.hbm_to_vmem [thread:$0]  %s2, 1024, %s49, [#allocation6], 64, 64, 4
    $region13: #{tpu_custom_call.1} parent=1 // pred_fallthru
      _
    // Predicated region
    $region14: #{tpu_custom_call.1} parent=1 // pred_check
      _
    $region15: #{tpu_custom_call.1} parent=1 // pred_check_branch
      %56 = sbr.rel (0) target = $region17
    $region16: #{tpu_custom_call.1} parent=1 // pred_region
      %s58 = ssub.s32 1024, 1024
      %59 = vsyncadd [#allocation9], %s58
      %s60 = sshll.u32 [#allocation8], 4
      %s61 = int_to_ptr.vmem [resolvable:$true] %s60
      %66 = dma.hbm_to_vmem [thread:$0]  %s3, 1024, %s61, [#allocation9], 64, 64, 4
    $region17: #{tpu_custom_call.1} parent=1 // pred_fallthru
      _
    // Predicated region
    $region18: #{tpu_custom_call.1} parent=1 // pred_check
      _
    $region19: #{tpu_custom_call.1} parent=1 // pred_check_branch
      %68 = sbr.rel (0) target = $region21
    $region20: #{tpu_custom_call.1} parent=1 // pred_region
      _
    $region21: #{tpu_custom_call.1} parent=1 // pred_fallthru
      _
    // Predicated region
    $region22: #{tpu_custom_call.1} parent=1 // pred_check
      _
    $region23: #{tpu_custom_call.1} parent=1 // pred_check_branch
      %70 = sbr.rel (0) target = $region25
    $region24: #{tpu_custom_call.1} parent=1 // pred_region
      %s72 = ssub.s32 1024, 1024
      %73 = vsyncadd [#allocation9], %s72
      %s74 = sshll.u32 [#allocation10], 4
      %s75 = int_to_ptr.vmem [resolvable:$true] %s74
      %80 = dma.hbm_to_vmem [thread:$0]  %s5, 1024, %s75, [#allocation9], 64, 64, 4
    $region25: #{tpu_custom_call.1} parent=1 // pred_fallthru
      _
    // Predicated region
    $region26: #{tpu_custom_call.1} parent=1 // pred_check
      _
    $region27: #{tpu_custom_call.1} parent=1 // pred_check_branch
      %82 = sbr.rel (0) target = $region29
    $region28: #{tpu_custom_call.1} parent=1 // pred_region
      _
    $region29: #{tpu_custom_call.1} parent=1 // pred_fallthru
      _
    // Predicated region
    $region30: #{tpu_custom_call.1} parent=1 // pred_check
      _
    $region31: #{tpu_custom_call.1} parent=1 // pred_check_branch
      %84 = sbr.rel (0) target = $region33
    $region32: #{tpu_custom_call.1} parent=1 // pred_region
      %s86 = ssub.s32 1024, 1024
      %87 = vsyncadd [#allocation12], %s86
      %s88 = sshll.u32 [#allocation11], 4
      %s89 = int_to_ptr.vmem [resolvable:$true] %s88
      %94 = dma.hbm_to_vmem [thread:$0]  %s7, 1024, %s89, [#allocation12], 64, 64, 4
    $region33: #{tpu_custom_call.1} parent=1 // pred_fallthru
      _
    // Predicated region
    $region34: #{tpu_custom_call.1} parent=1 // pred_check
      _
    $region35: #{tpu_custom_call.1} parent=1 // pred_check_branch
      %96 = sbr.rel (0) target = $region37
    $region36: #{tpu_custom_call.1} parent=1 // pred_region
      _
    $region37: #{tpu_custom_call.1} parent=1 // pred_fallthru
      _
    // Predicated region
    $region38: #{tpu_custom_call.1} parent=1 // pred_check
      _
    $region39: #{tpu_custom_call.1} parent=1 // pred_check_branch
      %98 = sbr.rel (0) target = $region41
    $region40: #{tpu_custom_call.1} parent=1 // pred_region
      %99 = dma.done [#allocation3], 128
    $region41: #{tpu_custom_call.1} parent=1 // pred_fallthru
      _
    // Predicated region
    $region42: #{tpu_custom_call.1} parent=1 // pred_check
      _
    $region43: #{tpu_custom_call.1} parent=1 // pred_check_branch
      %101 = sbr.rel (0) target = $region45
    $region44: #{tpu_custom_call.1} parent=1 // pred_region
      %102 = dma.done [#allocation6], 128
    $region45: #{tpu_custom_call.1} parent=1 // pred_fallthru
      _
    // Predicated region
    $region46: #{tpu_custom_call.1} parent=1 // pred_check
      _
    $region47: #{tpu_custom_call.1} parent=1 // pred_check_branch
      %104 = sbr.rel (0) target = $region49
    $region48: #{tpu_custom_call.1} parent=1 // pred_region
      %105 = dma.done [#allocation6], 1024
    $region49: #{tpu_custom_call.1} parent=1 // pred_fallthru
      _
    // Predicated region
    $region50: #{tpu_custom_call.1} parent=1 // pred_check
      _
    $region51: #{tpu_custom_call.1} parent=1 // pred_check_branch
      %107 = sbr.rel (0) target = $region53
    $region52: #{tpu_custom_call.1} parent=1 // pred_region
      %108 = dma.done [#allocation9], 1024
    $region53: #{tpu_custom_call.1} parent=1 // pred_fallthru
      _
    // Predicated region
    $region54: #{tpu_custom_call.1} parent=1 // pred_check
      _
    $region55: #{tpu_custom_call.1} parent=1 // pred_check_branch
      %110 = sbr.rel (0) target = $region57
    $region56: #{tpu_custom_call.1} parent=1 // pred_region
      %111 = dma.done [#allocation9], 1024
    $region57: #{tpu_custom_call.1} parent=1 // pred_fallthru
      _
    // Predicated region
    $region58: #{tpu_custom_call.1} parent=1 // pred_check
      _
    $region59: #{tpu_custom_call.1} parent=1 // pred_check_branch
      %113 = sbr.rel (0) target = $region61
    $region60: #{tpu_custom_call.1} parent=1 // pred_region
      %114 = dma.done [#allocation12], 1024
    $region61: #{tpu_custom_call.1} parent=1 // pred_fallthru
      _
    %v116 = vld [vmem:[#allocation2] sm:$0xf]
    %v117 = vld [vmem:[#allocation2 + $0x4] sm:$0xf]
    %v118 = vld [vmem:[#allocation7] sm:$0xf]
    %v119 = vld [vmem:[#allocation7 + $0x4] sm:$0xf]
    %v120 = vld [vmem:[#allocation7 + $0x8] sm:$0xf]
    %v121 = vld [vmem:[#allocation7 + $0xc] sm:$0xf]
    %v122 = vld [vmem:[#allocation7 + $0x10] sm:$0xf]
    %v123 = vld [vmem:[#allocation7 + $0x14] sm:$0xf]
    %v124 = vld [vmem:[#allocation7 + $0x18] sm:$0xf]
    %v125 = vld [vmem:[#allocation7 + $0x1c] sm:$0xf]
    %v126 = vld [vmem:[#allocation7 + $0x20] sm:$0xf]
    %v127 = vld [vmem:[#allocation7 + $0x24] sm:$0xf]
    %v128 = vld [vmem:[#allocation7 + $0x28] sm:$0xf]
    %v129 = vld [vmem:[#allocation7 + $0x2c] sm:$0xf]
    %v130 = vld [vmem:[#allocation7 + $0x30] sm:$0xf]
    %v131 = vld [vmem:[#allocation7 + $0x34] sm:$0xf]
    %v132 = vld [vmem:[#allocation7 + $0x38] sm:$0xf]
    %v133 = vld [vmem:[#allocation7 + $0x3c] sm:$0xf]
    %v134 = vld [vmem:[#allocation5] sm:$0xf]
    %v135 = vld [vmem:[#allocation5 + $0x4] sm:$0xf]
    %v136 = vld [vmem:[#allocation8] sm:$0xf]
    %v137 = vld [vmem:[#allocation8 + $0x4] sm:$0xf]
    %v138 = vld [vmem:[#allocation8 + $0x8] sm:$0xf]
    %v139 = vld [vmem:[#allocation8 + $0xc] sm:$0xf]
    %v140 = vld [vmem:[#allocation8 + $0x10] sm:$0xf]
    %v141 = vld [vmem:[#allocation8 + $0x14] sm:$0xf]
    %v142 = vld [vmem:[#allocation8 + $0x18] sm:$0xf]
    %v143 = vld [vmem:[#allocation8 + $0x1c] sm:$0xf]
    %v144 = vld [vmem:[#allocation8 + $0x20] sm:$0xf]
    %v145 = vld [vmem:[#allocation8 + $0x24] sm:$0xf]
    %v146 = vld [vmem:[#allocation8 + $0x28] sm:$0xf]
    %v147 = vld [vmem:[#allocation8 + $0x2c] sm:$0xf]
    %v148 = vld [vmem:[#allocation8 + $0x30] sm:$0xf]
    %v149 = vld [vmem:[#allocation8 + $0x34] sm:$0xf]
    %v150 = vld [vmem:[#allocation8 + $0x38] sm:$0xf]
    %v151 = vld [vmem:[#allocation8 + $0x3c] sm:$0xf]
    %v154 = vunpack.c.l.b16 %v134
    %v155 = vunpack.c.l.b16 %v135
    %v156 = vpack.c.b16 %v155, %v154
    %v174 = vunpack.c.l.b16 %v136
    %v175 = vunpack.c.l.b16 %v137
    %v176 = vunpack.c.l.b16 %v138
    %v177 = vunpack.c.l.b16 %v139
    %v178 = vunpack.c.l.b16 %v140
    %v179 = vunpack.c.l.b16 %v141
    %v180 = vunpack.c.l.b16 %v142
    %v181 = vunpack.c.l.b16 %v143
    %v182 = vunpack.c.l.b16 %v144
    %v183 = vunpack.c.l.b16 %v145
    %v184 = vunpack.c.l.b16 %v146
    %v185 = vunpack.c.l.b16 %v147
    %v186 = vunpack.c.l.b16 %v148
    %v187 = vunpack.c.l.b16 %v149
    %v188 = vunpack.c.l.b16 %v150
    %v189 = vunpack.c.l.b16 %v151
    %v190 = vpack.c.b16 %v175, %v174
    %v191 = vpack.c.b16 %v177, %v176
    %v192 = vpack.c.b16 %v179, %v178
    %v193 = vpack.c.b16 %v181, %v180
    %v194 = vpack.c.b16 %v183, %v182
    %v195 = vpack.c.b16 %v185, %v184
    %v196 = vpack.c.b16 %v187, %v186
    %v197 = vpack.c.b16 %v189, %v188
    %206 = vmatprep.subr.bf16.mxu0 0
    %207 = vmatpush1.bf16.msra.mxu0 %v190
    %208 = vmatprep.subr.bf16.mxu0 0
    %209 = vmatpush1.bf16.msra.mxu0 %v191
    %210 = vmatprep.subr.bf16.mxu0 0
    %211 = vmatpush1.bf16.msra.mxu0 %v192
    %212 = vmatprep.subr.bf16.mxu0 0
    %213 = vmatpush1.bf16.msra.mxu0 %v193
    %214 = vmatprep.subr.bf16.mxu0 0
    %215 = vmatpush1.bf16.msra.mxu0 %v194
    %216 = vmatprep.subr.bf16.mxu0 0
    %217 = vmatpush1.bf16.msra.mxu0 %v195
    %218 = vmatprep.subr.bf16.mxu0 0
    %219 = vmatpush1.bf16.msra.mxu0 %v196
    %220 = vmatprep.subr.bf16.mxu0 0
    %221 = vmatpush1.bf16.msra.mxu0 %v197
    %222 = vmatprep.subr.bf16.mxu0 0
    %223 = vmatpush1.bf16.msra.mxu0 0
    %224 = vmatprep.subr.bf16.mxu0 0
    %225 = vmatpush1.bf16.msra.mxu0 0
    %226 = vmatprep.subr.bf16.mxu0 0
    %227 = vmatpush1.bf16.msra.mxu0 0
    %228 = vmatprep.subr.bf16.mxu0 0
    %229 = vmatpush1.bf16.msra.mxu0 0
    %230 = vmatprep.subr.bf16.mxu0 0
    %231 = vmatpush1.bf16.msra.mxu0 0
    %232 = vmatprep.subr.bf16.mxu0 0
    %233 = vmatpush1.bf16.msra.mxu0 0
    %234 = vmatprep.subr.bf16.mxu0 0
    %235 = vmatpush1.bf16.msra.mxu0 0
    %236 = vmatprep.subr.bf16.mxu0 0
    %237 = vmatpush1.bf16.msra.mxu0 0
    %238 = vmatprep.mubr.bf16.mxu0 0
    %239 = vmatmul.mubr.bf16.gmra.mrb[0].mxu0 %v156
    %v240 = vpop.f32.mrb[0].mxu0
    %v241 = vadd.f32 0.0, %v240
    %v242 = vpop.f32.mrb[0].mxu0
    %v243 = vpop.f32.mrb[0].mxu0
    %v244 = vadd.f32 0.0, %v243
    %v245 = vpop.f32.mrb[0].mxu0
    %246 = vdwg.mxu0
    %v249 = vunpack.c.l.b16 %v116
    %v250 = vunpack.c.l.b16 %v117
    %v251 = vpack.c.b16 %v250, %v249
    %v269 = vunpack.c.l.b16 %v118
    %v270 = vunpack.c.l.b16 %v119
    %v271 = vunpack.c.l.b16 %v120
    %v272 = vunpack.c.l.b16 %v121
    %v273 = vunpack.c.l.b16 %v122
    %v274 = vunpack.c.l.b16 %v123
    %v275 = vunpack.c.l.b16 %v124
    %v276 = vunpack.c.l.b16 %v125
    %v277 = vunpack.c.l.b16 %v126
    %v278 = vunpack.c.l.b16 %v127
    %v279 = vunpack.c.l.b16 %v128
    %v280 = vunpack.c.l.b16 %v129
    %v281 = vunpack.c.l.b16 %v130
    %v282 = vunpack.c.l.b16 %v131
    %v283 = vunpack.c.l.b16 %v132
    %v284 = vunpack.c.l.b16 %v133
    %v285 = vpack.c.b16 %v270, %v269
    %v286 = vpack.c.b16 %v272, %v271
    %v287 = vpack.c.b16 %v274, %v273
    %v288 = vpack.c.b16 %v276, %v275
    %v289 = vpack.c.b16 %v278, %v277
    %v290 = vpack.c.b16 %v280, %v279
    %v291 = vpack.c.b16 %v282, %v281
    %v292 = vpack.c.b16 %v284, %v283
    %301 = vmatprep.subr.bf16.mxu0 0
    %302 = vmatpush1.bf16.msra.mxu0 %v285
    %303 = vmatprep.subr.bf16.mxu0 0
    %304 = vmatpush1.bf16.msra.mxu0 %v286
    %305 = vmatprep.subr.bf16.mxu0 0
    %306 = vmatpush1.bf16.msra.mxu0 %v287
    %307 = vmatprep.subr.bf16.mxu0 0
    %308 = vmatpush1.bf16.msra.mxu0 %v288
    %309 = vmatprep.subr.bf16.mxu0 0
    %310 = vmatpush1.bf16.msra.mxu0 %v289
    %311 = vmatprep.subr.bf16.mxu0 0
    %312 = vmatpush1.bf16.msra.mxu0 %v290
    %313 = vmatprep.subr.bf16.mxu0 0
    %314 = vmatpush1.bf16.msra.mxu0 %v291
    %315 = vmatprep.subr.bf16.mxu0 0
    %316 = vmatpush1.bf16.msra.mxu0 %v292
    %317 = vmatprep.subr.bf16.mxu0 0
    %318 = vmatpush1.bf16.msra.mxu0 0
    %319 = vmatprep.subr.bf16.mxu0 0
    %320 = vmatpush1.bf16.msra.mxu0 0
    %321 = vmatprep.subr.bf16.mxu0 0
    %322 = vmatpush1.bf16.msra.mxu0 0
    %323 = vmatprep.subr.bf16.mxu0 0
    %324 = vmatpush1.bf16.msra.mxu0 0
    %325 = vmatprep.subr.bf16.mxu0 0
    %326 = vmatpush1.bf16.msra.mxu0 0
    %327 = vmatprep.subr.bf16.mxu0 0
    %328 = vmatpush1.bf16.msra.mxu0 0
    %329 = vmatprep.subr.bf16.mxu0 0
    %330 = vmatpush1.bf16.msra.mxu0 0
    %331 = vmatprep.subr.bf16.mxu0 0
    %332 = vmatpush1.bf16.msra.mxu0 0
    %333 = vmatprep.mubr.bf16.mxu0 0
    %334 = vmatmul.mubr.bf16.gmra.mrb[0].mxu0 %v251
    %v335 = vpop.f32.mrb[0].mxu0
    %v336 = vadd.f32 %v241, %v335
    %v337 = vpop.f32.mrb[0].mxu0
    %v338 = vpop.f32.mrb[0].mxu0
    %v339 = vadd.f32 %v244, %v338
    %v340 = vpop.f32.mrb[0].mxu0
    %341 = vdwg.mxu0
    %v342 = vld [vmem:[%s4] sm:$0x1]
    %v344 = vlaneseq
    %v345 = vshrl.u32 %v344, 7
    %v346 = vsub.s32 0, %v345
    %v347 = vrot.slane %v342, %v346
    %v349 = vadd.f32 %v336, %v347
    %v350 = vadd.f32 %v339, %v347
    %v351 = vmul.f32 %v349, %v349
    %v352 = vmul.f32 %v350, %v350
    %v353 = vmul.f32 %v349, %v351
    %v354 = vmul.f32 %v350, %v352
    %v355 = vmul.f32 %v353, 0.044715
    %v356 = vmul.f32 %v354, 0.044715
    %v357 = vadd.f32 %v349, %v355
    %v358 = vadd.f32 %v350, %v356
    %v359 = vmul.f32 %v357, 0.7978846
    %v360 = vmul.f32 %v358, 0.7978846
    %v361 = vtanh.pop %v359
    %v362 = vtanh.pop %v360
    %v363 = vadd.f32 %v361, 1.0
    %v364 = vadd.f32 %v362, 1.0
    %v365 = vmul.f32 %v363, 0.5
    %v366 = vmul.f32 %v364, 0.5
    %v367 = vmul.f32 %v349, %v365
    %v368 = vmul.f32 %v350, %v366
    %v369 = vpack.c.bf16 %v368, %v367
    %v370 = vld [vmem:[#allocation10] sm:$0xf]
    %v371 = vld [vmem:[#allocation10 + $0x4] sm:$0xf]
    %v372 = vld [vmem:[#allocation10 + $0x8] sm:$0xf]
    %v373 = vld [vmem:[#allocation10 + $0xc] sm:$0xf]
    %v374 = vld [vmem:[#allocation10 + $0x10] sm:$0xf]
    %v375 = vld [vmem:[#allocation10 + $0x14] sm:$0xf]
    %v376 = vld [vmem:[#allocation10 + $0x18] sm:$0xf]
    %v377 = vld [vmem:[#allocation10 + $0x1c] sm:$0xf]
    %v378 = vld [vmem:[#allocation10 + $0x20] sm:$0xf]
    %v379 = vld [vmem:[#allocation10 + $0x24] sm:$0xf]
    %v380 = vld [vmem:[#allocation10 + $0x28] sm:$0xf]
    %v381 = vld [vmem:[#allocation10 + $0x2c] sm:$0xf]
    %v382 = vld [vmem:[#allocation10 + $0x30] sm:$0xf]
    %v383 = vld [vmem:[#allocation10 + $0x34] sm:$0xf]
    %v384 = vld [vmem:[#allocation10 + $0x38] sm:$0xf]
    %v385 = vld [vmem:[#allocation10 + $0x3c] sm:$0xf]
    %v386 = vld [vmem:[%s6] sm:$0x1]
    %v388 = vlaneseq
    %v389 = vshrl.u32 %v388, 7
    %v390 = vsub.s32 0, %v389
    %v391 = vrot.slane %v386, %v390
    %v409 = vunpack.c.l.b16 %v370
    %v410 = vunpack.c.l.b16 %v371
    %v411 = vunpack.c.l.b16 %v372
    %v412 = vunpack.c.l.b16 %v373
    %v413 = vunpack.c.l.b16 %v374
    %v414 = vunpack.c.l.b16 %v375
    %v415 = vunpack.c.l.b16 %v376
    %v416 = vunpack.c.l.b16 %v377
    %v417 = vunpack.c.l.b16 %v378
    %v418 = vunpack.c.l.b16 %v379
    %v419 = vunpack.c.l.b16 %v380
    %v420 = vunpack.c.l.b16 %v381
    %v421 = vunpack.c.l.b16 %v382
    %v422 = vunpack.c.l.b16 %v383
    %v423 = vunpack.c.l.b16 %v384
    %v424 = vunpack.c.l.b16 %v385
    %v425 = vpack.c.b16 %v410, %v409
    %v426 = vpack.c.b16 %v412, %v411
    %v427 = vpack.c.b16 %v414, %v413
    %v428 = vpack.c.b16 %v416, %v415
    %v429 = vpack.c.b16 %v418, %v417
    %v430 = vpack.c.b16 %v420, %v419
    %v431 = vpack.c.b16 %v422, %v421
    %v432 = vpack.c.b16 %v424, %v423
    %441 = vmatprep.subr.bf16.mxu0 0
    %442 = vmatpush1.bf16.msra.mxu0 %v425
    %443 = vmatprep.subr.bf16.mxu0 0
    %444 = vmatpush1.bf16.msra.mxu0 %v426
    %445 = vmatprep.subr.bf16.mxu0 0
    %446 = vmatpush1.bf16.msra.mxu0 %v427
    %447 = vmatprep.subr.bf16.mxu0 0
    %448 = vmatpush1.bf16.msra.mxu0 %v428
    %449 = vmatprep.subr.bf16.mxu0 0
    %450 = vmatpush1.bf16.msra.mxu0 %v429
    %451 = vmatprep.subr.bf16.mxu0 0
    %452 = vmatpush1.bf16.msra.mxu0 %v430
    %453 = vmatprep.subr.bf16.mxu0 0
    %454 = vmatpush1.bf16.msra.mxu0 %v431
    %455 = vmatprep.subr.bf16.mxu0 0
    %456 = vmatpush1.bf16.msra.mxu0 %v432
    %457 = vmatprep.subr.bf16.mxu0 0
    %458 = vmatpush1.bf16.msra.mxu0 0
    %459 = vmatprep.subr.bf16.mxu0 0
    %460 = vmatpush1.bf16.msra.mxu0 0
    %461 = vmatprep.subr.bf16.mxu0 0
    %462 = vmatpush1.bf16.msra.mxu0 0
    %463 = vmatprep.subr.bf16.mxu0 0
    %464 = vmatpush1.bf16.msra.mxu0 0
    %465 = vmatprep.subr.bf16.mxu0 0
    %466 = vmatpush1.bf16.msra.mxu0 0
    %467 = vmatprep.subr.bf16.mxu0 0
    %468 = vmatpush1.bf16.msra.mxu0 0
    %469 = vmatprep.subr.bf16.mxu0 0
    %470 = vmatpush1.bf16.msra.mxu0 0
    %471 = vmatprep.subr.bf16.mxu0 0
    %472 = vmatpush1.bf16.msra.mxu0 0
    %473 = vmatprep.mubr.bf16.mxu0 0
    %474 = vmatmul.mubr.bf16.gmra.mrb[0].mxu0 %v369
    %v475 = vpop.f32.mrb[0].mxu0
    %v476 = vadd.f32 %v391, %v475
    %v477 = vpop.f32.mrb[0].mxu0
    %v478 = vpop.f32.mrb[0].mxu0
    %v479 = vadd.f32 %v391, %v478
    %v480 = vpop.f32.mrb[0].mxu0
    %481 = vdwg.mxu0
    %v482 = vmul.f32 %v476, %v476
    %v483 = vmul.f32 %v479, %v479
    %v484 = vmul.f32 %v476, %v482
    %v485 = vmul.f32 %v479, %v483
    %v486 = vmul.f32 %v484, 0.044715
    %v487 = vmul.f32 %v485, 0.044715
    %v488 = vadd.f32 %v476, %v486
    %v489 = vadd.f32 %v479, %v487
    %v490 = vmul.f32 %v488, 0.7978846
    %v491 = vmul.f32 %v489, 0.7978846
    %v492 = vtanh.pop %v490
    %v493 = vtanh.pop %v491
    %v494 = vadd.f32 %v492, 1.0
    %v495 = vadd.f32 %v493, 1.0
    %v496 = vmul.f32 %v494, 0.5
    %v497 = vmul.f32 %v495, 0.5
    %v498 = vmul.f32 %v476, %v496
    %v499 = vmul.f32 %v479, %v497
    %v500 = vpack.c.bf16 %v499, %v498
    %v501 = vld [vmem:[#allocation11] sm:$0xf]
    %v502 = vld [vmem:[#allocation11 + $0x4] sm:$0xf]
    %v503 = vld [vmem:[#allocation11 + $0x8] sm:$0xf]
    %v504 = vld [vmem:[#allocation11 + $0xc] sm:$0xf]
    %v505 = vld [vmem:[#allocation11 + $0x10] sm:$0xf]
    %v506 = vld [vmem:[#allocation11 + $0x14] sm:$0xf]
    %v507 = vld [vmem:[#allocation11 + $0x18] sm:$0xf]
    %v508 = vld [vmem:[#allocation11 + $0x1c] sm:$0xf]
    %v509 = vld [vmem:[#allocation11 + $0x20] sm:$0xf]
    %v510 = vld [vmem:[#allocation11 + $0x24] sm:$0xf]
    %v511 = vld [vmem:[#allocation11 + $0x28] sm:$0xf]
    %v512 = vld [vmem:[#allocation11 + $0x2c] sm:$0xf]
    %v513 = vld [vmem:[#allocation11 + $0x30] sm:$0xf]
    %v514 = vld [vmem:[#allocation11 + $0x34] sm:$0xf]
    %v515 = vld [vmem:[#allocation11 + $0x38] sm:$0xf]
    %v516 = vld [vmem:[#allocation11 + $0x3c] sm:$0xf]
    %v517 = vld [vmem:[%s8] sm:$0x1]
    %v519 = vlaneseq
    %v520 = vshrl.u32 %v519, 7
    %v521 = vsub.s32 0, %v520
    %v522 = vrot.slane %v517, %v521
    %v540 = vunpack.c.l.b16 %v501
    %v541 = vunpack.c.l.b16 %v502
    %v542 = vunpack.c.l.b16 %v503
    %v543 = vunpack.c.l.b16 %v504
    %v544 = vunpack.c.l.b16 %v505
    %v545 = vunpack.c.l.b16 %v506
    %v546 = vunpack.c.l.b16 %v507
    %v547 = vunpack.c.l.b16 %v508
    %v548 = vunpack.c.l.b16 %v509
    %v549 = vunpack.c.l.b16 %v510
    %v550 = vunpack.c.l.b16 %v511
    %v551 = vunpack.c.l.b16 %v512
    %v552 = vunpack.c.l.b16 %v513
    %v553 = vunpack.c.l.b16 %v514
    %v554 = vunpack.c.l.b16 %v515
    %v555 = vunpack.c.l.b16 %v516
    %v556 = vpack.c.b16 %v541, %v540
    %v557 = vpack.c.b16 %v543, %v542
    %v558 = vpack.c.b16 %v545, %v544
    %v559 = vpack.c.b16 %v547, %v546
    %v560 = vpack.c.b16 %v549, %v548
    %v561 = vpack.c.b16 %v551, %v550
    %v562 = vpack.c.b16 %v553, %v552
    %v563 = vpack.c.b16 %v555, %v554
    %572 = vmatprep.subr.bf16.mxu0 0
    %573 = vmatpush1.bf16.msra.mxu0 %v556
    %574 = vmatprep.subr.bf16.mxu0 0
    %575 = vmatpush1.bf16.msra.mxu0 %v557
    %576 = vmatprep.subr.bf16.mxu0 0
    %577 = vmatpush1.bf16.msra.mxu0 %v558
    %578 = vmatprep.subr.bf16.mxu0 0
    %579 = vmatpush1.bf16.msra.mxu0 %v559
    %580 = vmatprep.subr.bf16.mxu0 0
    %581 = vmatpush1.bf16.msra.mxu0 %v560
    %582 = vmatprep.subr.bf16.mxu0 0
    %583 = vmatpush1.bf16.msra.mxu0 %v561
    %584 = vmatprep.subr.bf16.mxu0 0
    %585 = vmatpush1.bf16.msra.mxu0 %v562
    %586 = vmatprep.subr.bf16.mxu0 0
    %587 = vmatpush1.bf16.msra.mxu0 %v563
    %588 = vmatprep.subr.bf16.mxu0 0
    %589 = vmatpush1.bf16.msra.mxu0 0
    %590 = vmatprep.subr.bf16.mxu0 0
    %591 = vmatpush1.bf16.msra.mxu0 0
    %592 = vmatprep.subr.bf16.mxu0 0
    %593 = vmatpush1.bf16.msra.mxu0 0
    %594 = vmatprep.subr.bf16.mxu0 0
    %595 = vmatpush1.bf16.msra.mxu0 0
    %596 = vmatprep.subr.bf16.mxu0 0
    %597 = vmatpush1.bf16.msra.mxu0 0
    %598 = vmatprep.subr.bf16.mxu0 0
    %599 = vmatpush1.bf16.msra.mxu0 0
    %600 = vmatprep.subr.bf16.mxu0 0
    %601 = vmatpush1.bf16.msra.mxu0 0
    %602 = vmatprep.subr.bf16.mxu0 0
    %603 = vmatpush1.bf16.msra.mxu0 0
    %604 = vmatprep.mubr.bf16.mxu0 0
    %605 = vmatmul.mubr.bf16.gmra.mrb[0].mxu0 %v500
    %v606 = vpop.f32.mrb[0].mxu0
    %v607 = vadd.f32 %v522, %v606
    %v608 = vpop.f32.mrb[0].mxu0
    %v609 = vpop.f32.mrb[0].mxu0
    %v610 = vadd.f32 %v522, %v609
    %v611 = vpop.f32.mrb[0].mxu0
    %612 = vdwg.mxu0
    %613 = vst [vmem:[#allocation13] sm:$0xff] %v607
    %614 = vst [vmem:[#allocation13 + $0x8] sm:$0xff] %v610
    // Predicated region
    $region62: #{tpu_custom_call.1} parent=1 // pred_check
      _
    $region63: #{tpu_custom_call.1} parent=1 // pred_check_branch
      %616 = sbr.rel (0) target = $region65
    $region64: #{tpu_custom_call.1} parent=1 // pred_region
      %s618 = ssub.s32 256, 256
      %619 = vsyncadd [#allocation4], %s618
      %s620 = sshll.u32 [#allocation13], 4
      %s621 = int_to_ptr.vmem [resolvable:$true] %s620
      %626 = dma.vmem_to_hbm [thread:$0]  %s621, 256, %s9, [#allocation4], 128, 128, 8
    $region65: #{tpu_custom_call.1} parent=1 // pred_fallthru
      _
    // Predicated region
    $region66: #{tpu_custom_call.1} parent=1 // pred_check
      _
    $region67: #{tpu_custom_call.1} parent=1 // pred_check_branch
      %628 = sbr.rel (0) target = $region69
    $region68: #{tpu_custom_call.1} parent=1 // pred_region
      %629 = dma.done [#allocation4], 256
    $region69: #{tpu_custom_call.1} parent=1 // pred_fallthru
      _
    %630 = vsyncpa [#allocation3], 1
    %631 = vsyncpa [#allocation6], 1
    %632 = vsyncpa [#allocation9], 1
    %633 = vsyncpa [#allocation12], 1
    %634 = vsyncpa [#allocation4], 1

</llo_original>
